<compile_context>
chip_gen: v6e
topology: v6e:2x2x1
jax: 0.10.0
libtpu: 0.0.40
codegen_flags: <defaults>
</compile_context>

<pallas_src>
import functools

import jax
import jax.numpy as jnp
from jax.experimental import pallas as pl
from jax.experimental.pallas import tpu as pltpu


def sae_fwd_kernel(x_ref, w_enc_ref, b_enc_ref, w_dec_ref, b_dec_ref,
                   xhat_ref, fx_ref, mse_ref, sp_ref,
                   acc_ref, sp_acc_ref):
    j = pl.program_id(1)
    nj = pl.num_programs(1)

    @pl.when(j == 0)
    def _init():
        acc_ref[...] = jnp.zeros_like(acc_ref)
        sp_acc_ref[...] = jnp.zeros_like(sp_acc_ref)

    x_f32 = x_ref[...]                                   # (tb, d_in) f32
    x_bf = x_f32.astype(jnp.bfloat16)                    # bf16 MXU operand

    # Encoder slab: h_pre[:, j-tile] = x @ W_enc[:, j-tile] + (b_enc - b_dec @ W_enc)
    h_pre = jnp.dot(x_bf, w_enc_ref[...],
                    preferred_element_type=jnp.float32) + b_enc_ref[...]
    f = jnp.maximum(h_pre, 0.0)                          # relu, f32

    fx_ref[...] = f.astype(fx_ref.dtype)
    # relu output is non-negative, so sum(f) == sum(|f|).
    sp_acc_ref[...] += jnp.sum(f, axis=-1, keepdims=True)

    # Decoder partial: accumulate f @ W_dec[j-tile, :] into the resident f32 acc.
    acc_ref[...] += jnp.dot(f.astype(jnp.bfloat16), w_dec_ref[...],
                            preferred_element_type=jnp.float32)

    @pl.when(j == nj - 1)
    def _finalize():
        x_hat = acc_ref[...] + b_dec_ref[...]
        xhat_ref[...] = x_hat.astype(xhat_ref.dtype)

        # mse partial: sum_rows[ sum_d (x_hat - x)^2 * rsqrt(sum_d x^2) ]
        # (rsqrt goes to the EUP; no per-element divide.)
        err2 = (x_hat - x_f32) ** 2
        row_err = jnp.sum(err2, axis=-1, keepdims=True)                   # (tb, 1)
        inv_norm = jax.lax.rsqrt(jnp.sum(x_f32 * x_f32, axis=-1, keepdims=True))
        mse_part = jnp.sum(row_err * inv_norm)                            # scalar
        sp_part = jnp.sum(sp_acc_ref[...])                                # scalar

        # Lane-dense (1,1,128) scalar slabs -> unmasked vector stores.
        mse_ref[...] = jnp.full((1, 1, 128), mse_part, jnp.float32)
        sp_ref[...] = jnp.full((1, 1, 128), sp_part, jnp.float32)


@functools.partial(jax.jit, static_argnames=("l1_coefficient", "block_batch",
                                              "block_sae", "feature_dtype"))
def sae_forward(x, w_enc, b_enc, w_dec, b_dec, *, l1_coefficient=1e-3,
                block_batch=128, block_sae=256, feature_dtype=jnp.float32):
    batch, d_in = x.shape
    d_sae = w_enc.shape[1]
    block_batch = min(block_batch, batch)
    block_sae = min(block_sae, d_sae)
    assert batch % block_batch == 0, "batch must be divisible by block_batch"
    assert d_sae % block_sae == 0, "d_sae must be divisible by block_sae"
    ni = batch // block_batch
    nj = d_sae // block_sae

    x = x.astype(jnp.float32)
    w_enc_f32 = w_enc.astype(jnp.float32)
    # Fold b_dec into the encoder bias (done once, in f32, on the host/XLA side).
    b_enc_eff = (b_enc.astype(jnp.float32)
                 - b_dec.astype(jnp.float32) @ w_enc_f32).reshape(1, d_sae)
    w_enc_bf = w_enc.astype(jnp.bfloat16)
    w_dec_bf = w_dec.astype(jnp.bfloat16)
    b_dec2 = b_dec.astype(jnp.float32).reshape(1, d_in)

    x_hat, f_x, mse_parts, sp_parts = pl.pallas_call(
        sae_fwd_kernel,
        out_shape=(
            jax.ShapeDtypeStruct((batch, d_in), jnp.float32),
            jax.ShapeDtypeStruct((batch, d_sae), feature_dtype),
            jax.ShapeDtypeStruct((ni, 1, 128), jnp.float32),
            jax.ShapeDtypeStruct((ni, 1, 128), jnp.float32),
        ),
        grid_spec=pltpu.PrefetchScalarGridSpec(
            num_scalar_prefetch=0,
            grid=(ni, nj),
            in_specs=[
                pl.BlockSpec((block_batch, d_in), lambda i, j: (i, 0)),
                pl.BlockSpec((d_in, block_sae), lambda i, j: (0, j)),
                pl.BlockSpec((1, block_sae), lambda i, j: (0, j)),
                pl.BlockSpec((block_sae, d_in), lambda i, j: (j, 0)),
                pl.BlockSpec((1, d_in), lambda i, j: (0, 0)),
            ],
            out_specs=[
                pl.BlockSpec((block_batch, d_in), lambda i, j: (i, 0)),
                pl.BlockSpec((block_batch, block_sae), lambda i, j: (i, j)),
                pl.BlockSpec((1, 1, 128), lambda i, j: (i, 0, 0)),
                pl.BlockSpec((1, 1, 128), lambda i, j: (i, 0, 0)),
            ],
            scratch_shapes=[
                pltpu.VMEM((block_batch, d_in), jnp.float32),   # x_hat accumulator
                pltpu.VMEM((block_batch, 1), jnp.float32),      # per-row L1 accumulator
            ],
        ),
        compiler_params=pltpu.CompilerParams(
            dimension_semantics=("parallel", "arbitrary")),
    )(x, w_enc_bf, b_enc_eff, w_dec_bf, b_dec2)

    # Final scalar reductions (cheap glue; mirrors torch .mean() semantics).
    mse_loss = jnp.sum(mse_parts[:, 0, 0]) / (batch * d_in)     # mean over all elems
    sparsity = jnp.sum(sp_parts[:, 0, 0]) / batch               # mean per-row L1
    l1_loss = l1_coefficient * sparsity
    # TODO(synk): ghost-grad branch needs dead_neuron_mask + training mode; not part of inference path.
    mse_loss_ghost_resid = jnp.float32(0.0)
    loss = mse_loss + l1_loss + mse_loss_ghost_resid
    return x_hat, f_x, loss, mse_loss, l1_loss, mse_loss_ghost_resid


def init_params(key, d_in, d_sae, dtype=jnp.float32):
    """Deterministic kaiming-uniform-like init matching the PyTorch module's shapes."""
    k1, k2 = jax.random.split(key)
    bound_enc = (2.0 ** 0.5) * (3.0 / d_sae) ** 0.5
    w_enc = jax.random.uniform(k1, (d_in, d_sae), dtype, -bound_enc, bound_enc)
    bound_dec = (2.0 ** 0.5) * (3.0 / d_in) ** 0.5
    w_dec = jax.random.uniform(k2, (d_sae, d_in), dtype, -bound_dec, bound_dec)
    w_dec = w_dec / jnp.linalg.norm(w_dec, axis=1, keepdims=True)
    b_enc = jnp.zeros((d_sae,), dtype)
    b_dec = jnp.zeros((d_in,), dtype)
    return w_enc, b_enc, w_dec, b_dec


def reference_forward(x, w_enc, b_enc, w_dec, b_dec, l1_coefficient):
    """Pure-JAX f32 reference (matches the PyTorch forward)."""
    h_pre = (x - b_dec) @ w_enc + b_enc
    f_x = jnp.maximum(h_pre, 0.0)
    x_hat = f_x @ w_dec + b_dec
    # NOTE: all-zero input rows give inf/NaN here, same as the PyTorch module.
    mse = jnp.mean((x_hat - x) ** 2 /
                   jnp.sqrt(jnp.sum(x ** 2, axis=-1, keepdims=True)))
    l1 = l1_coefficient * jnp.mean(jnp.sum(jnp.abs(f_x), axis=1))
    return x_hat, f_x, mse + l1, mse, l1


if __name__ == "__main__":
    batch, d_in, d_sae = 256, 256, 512
    l1_coefficient = 1e-3

    key = jax.random.PRNGKey(0)
    kx, kp, kb = jax.random.split(key, 3)
    x = jax.random.normal(kx, (batch, d_in), jnp.float32)
    w_enc, b_enc, w_dec, b_dec = init_params(kp, d_in, d_sae)
    # make b_dec nonzero so the folded-bias / (+ b_dec) paths are exercised
    b_dec = 0.01 * jax.random.normal(kb, (d_in,), jnp.float32)

    outs = sae_forward(x, w_enc, b_enc, w_dec, b_dec,
                       l1_coefficient=l1_coefficient,
                       block_batch=128, block_sae=256)
    x_hat, f_x, loss, mse_loss, l1_loss, ghost = jax.block_until_ready(outs)

    # Sanity check against the pure-f32 reference. The kernel drives the MXU with
    # bf16 operands (f32 accumulation), so tolerances are loosened accordingly.
    rx_hat, rf_x, rloss, rmse, rl1 = reference_forward(
        x, w_enc, b_enc, w_dec, b_dec, l1_coefficient)
    assert jnp.allclose(x_hat, rx_hat, atol=1e-1, rtol=5e-2)
    assert jnp.allclose(f_x, rf_x, atol=1e-1, rtol=5e-2)
    assert jnp.allclose(mse_loss, rmse, atol=1e-4, rtol=2e-2)
    assert jnp.allclose(l1_loss, rl1, atol=1e-6, rtol=2e-2)
    assert jnp.allclose(loss, rloss, atol=1e-4, rtol=2e-2)
    assert float(ghost) == 0.0
    assert jnp.all(jnp.isfinite(x_hat)) and jnp.all(jnp.isfinite(f_x))

    print("KERNEL_OK")
</pallas_src>

<mosaic_0001>
module attributes {stable_mosaic.version = 11 : i64} {
  func.func @sae_fwd_kernel(%arg0: i32, %arg1: i32, %arg2: memref<128x256xf32, #tpu.memory_space<vmem>>, %arg3: memref<256x256xbf16, #tpu.memory_space<vmem>>, %arg4: memref<1x256xf32, #tpu.memory_space<vmem>>, %arg5: memref<256x256xbf16, #tpu.memory_space<vmem>>, %arg6: memref<1x256xf32, #tpu.memory_space<vmem>>, %arg7: memref<128x256xf32, #tpu.memory_space<vmem>>, %arg8: memref<128x256xf32, #tpu.memory_space<vmem>>, %arg9: memref<1x1x128xf32, #tpu.memory_space<vmem>>, %arg10: memref<1x1x128xf32, #tpu.memory_space<vmem>>, %arg11: memref<128x256xf32, #tpu.memory_space<vmem>>, %arg12: memref<128x1xf32, #tpu.memory_space<vmem>>) attributes {dimension_semantics = [#tpu.dimension_semantics<parallel>, #tpu.dimension_semantics<arbitrary>], iteration_bounds = array<i64: 2, 2>, scalar_prefetch = 0 : i64, scratch_operands = 2 : i64, tpu.core_type = #tpu.core_type<tc>, window_params = [{transform_indices = @transform_0, window_bounds = array<i64: 128, 256>}, {transform_indices = @transform_1, window_bounds = array<i64: 256, 256>}, {transform_indices = @transform_2, window_bounds = array<i64: 1, 256>}, {transform_indices = @transform_3, window_bounds = array<i64: 256, 256>}, {pipeline_mode = #tpu.pipeline_mode<synchronous>, transform_indices = @transform_4, window_bounds = array<i64: 1, 256>}, {transform_indices = @transform_5, window_bounds = array<i64: 128, 256>}, {transform_indices = @transform_6, window_bounds = array<i64: 128, 256>}, {transform_indices = @transform_7, window_bounds = array<i64: 1, 1, 128>}, {transform_indices = @transform_8, window_bounds = array<i64: 1, 1, 128>}]} {
    %c0_i32 = arith.constant 0 : i32
    %0 = arith.cmpi eq, %arg1, %c0_i32 : i32
    %1 = arith.extui %0 : i1 to i32
    %c0_i32_0 = arith.constant 0 : i32
    %2 = arith.cmpi ne, %1, %c0_i32_0 : i32
    scf.if %2 {
      %cst_22 = arith.constant 0.000000e+00 : f32
      %27 = vector.broadcast %cst_22 : f32 to vector<128x256xf32>
      %c0_23 = arith.constant 0 : index
      %c0_24 = arith.constant 0 : index
      %28 = vector.load %arg11[%c0_23, %c0_24] : memref<128x256xf32, #tpu.memory_space<vmem>>, vector<128x256xf32>
      tpu.vector_store %arg11[%c0_23, %c0_24], %27 {strides = array<i32>} : memref<128x256xf32, #tpu.memory_space<vmem>>, vector<128x256xf32>,
      %cst_25 = arith.constant 0.000000e+00 : f32
      %29 = vector.broadcast %cst_25 : f32 to vector<128x1xf32>
      %c0_26 = arith.constant 0 : index
      %c0_27 = arith.constant 0 : index
      %30 = vector.load %arg12[%c0_26, %c0_27] : memref<128x1xf32, #tpu.memory_space<vmem>>, vector<128x1xf32>
      tpu.vector_store %arg12[%c0_26, %c0_27], %29 {strides = array<i32>} : memref<128x1xf32, #tpu.memory_space<vmem>>, vector<128x1xf32>,
    } else {
    }
    %c0 = arith.constant 0 : index
    %c0_1 = arith.constant 0 : index
    %3 = vector.load %arg2[%c0, %c0_1] : memref<128x256xf32, #tpu.memory_space<vmem>>, vector<128x256xf32>
    %4 = arith.truncf %3 : vector<128x256xf32> to vector<128x256xbf16>
    %c0_2 = arith.constant 0 : index
    %c0_3 = arith.constant 0 : index
    %5 = vector.load %arg3[%c0_2, %c0_3] : memref<256x256xbf16, #tpu.memory_space<vmem>>, vector<256x256xbf16>
    %cst = arith.constant dense<0.000000e+00> : vector<128x256xf32>
    %6 = tpu.matmul %4, %5, %cst {dimension_numbers = #tpu.dot_dimension_numbers<[1], [0], [0], [1], [0, 0, 1, 1], [], []>} : vector<128x256xbf16>, vector<256x256xbf16>, vector<128x256xf32> -> vector<128x256xf32>
    %c0_4 = arith.constant 0 : index
    %c0_5 = arith.constant 0 : index
    %7 = vector.load %arg4[%c0_4, %c0_5] : memref<1x256xf32, #tpu.memory_space<vmem>>, vector<1x256xf32>
    %8 = vector.broadcast %7 : vector<1x256xf32> to vector<128x256xf32>
    %9 = arith.addf %6, %8 : vector<128x256xf32>
    %cst_6 = arith.constant 0.000000e+00 : f32
    %10 = vector.broadcast %cst_6 : f32 to vector<128x256xf32>
    %11 = arith.maximumf %9, %10 : vector<128x256xf32>
    %c0_7 = arith.constant 0 : index
    %c0_8 = arith.constant 0 : index
    %12 = vector.load %arg8[%c0_7, %c0_8] : memref<128x256xf32, #tpu.memory_space<vmem>>, vector<128x256xf32>
    tpu.vector_store %arg8[%c0_7, %c0_8], %11 {strides = array<i32>} : memref<128x256xf32, #tpu.memory_space<vmem>>, vector<128x256xf32>,
    %c0_9 = arith.constant 0 : index
    %c0_10 = arith.constant 0 : index
    %13 = vector.load %arg12[%c0_9, %c0_10] : memref<128x1xf32, #tpu.memory_space<vmem>>, vector<128x1xf32>
    %cst_11 = arith.constant dense<0.000000e+00> : vector<128xf32>
    %14 = vector.multi_reduction <add>, %11, %cst_11 [1] : vector<128x256xf32> to vector<128xf32>
    %15 = vector.shape_cast %14 : vector<128xf32> to vector<128x1xf32>
    %16 = arith.addf %13, %15 : vector<128x1xf32>
    %c0_12 = arith.constant 0 : index
    %c0_13 = arith.constant 0 : index
    %17 = vector.load %arg12[%c0_12, %c0_13] : memref<128x1xf32, #tpu.memory_space<vmem>>, vector<128x1xf32>
    tpu.vector_store %arg12[%c0_12, %c0_13], %16 {strides = array<i32>} : memref<128x1xf32, #tpu.memory_space<vmem>>, vector<128x1xf32>,
    %c0_14 = arith.constant 0 : index
    %c0_15 = arith.constant 0 : index
    %18 = vector.load %arg11[%c0_14, %c0_15] : memref<128x256xf32, #tpu.memory_space<vmem>>, vector<128x256xf32>
    %19 = arith.truncf %11 : vector<128x256xf32> to vector<128x256xbf16>
    %c0_16 = arith.constant 0 : index
    %c0_17 = arith.constant 0 : index
    %20 = vector.load %arg5[%c0_16, %c0_17] : memref<256x256xbf16, #tpu.memory_space<vmem>>, vector<256x256xbf16>
    %cst_18 = arith.constant dense<0.000000e+00> : vector<128x256xf32>
    %21 = tpu.matmul %19, %20, %cst_18 {dimension_numbers = #tpu.dot_dimension_numbers<[1], [0], [0], [1], [0, 0, 1, 1], [], []>} : vector<128x256xbf16>, vector<256x256xbf16>, vector<128x256xf32> -> vector<128x256xf32>
    %22 = arith.addf %18, %21 : vector<128x256xf32>
    %c0_19 = arith.constant 0 : index
    %c0_20 = arith.constant 0 : index
    %23 = vector.load %arg11[%c0_19, %c0_20] : memref<128x256xf32, #tpu.memory_space<vmem>>, vector<128x256xf32>
    tpu.vector_store %arg11[%c0_19, %c0_20], %22 {strides = array<i32>} : memref<128x256xf32, #tpu.memory_space<vmem>>, vector<128x256xf32>,
    %c1_i32 = arith.constant 1 : i32
    %24 = arith.cmpi eq, %arg1, %c1_i32 : i32
    %25 = arith.extui %24 : i1 to i32
    %c0_i32_21 = arith.constant 0 : i32
    %26 = arith.cmpi ne, %25, %c0_i32_21 : i32
    scf.if %26 {
      %c0_22 = arith.constant 0 : index
      %c0_23 = arith.constant 0 : index
      %27 = vector.load %arg11[%c0_22, %c0_23] : memref<128x256xf32, #tpu.memory_space<vmem>>, vector<128x256xf32>
      %c0_24 = arith.constant 0 : index
      %c0_25 = arith.constant 0 : index
      %28 = vector.load %arg6[%c0_24, %c0_25] : memref<1x256xf32, #tpu.memory_space<vmem>>, vector<1x256xf32>
      %29 = vector.broadcast %28 : vector<1x256xf32> to vector<128x256xf32>
      %30 = arith.addf %27, %29 : vector<128x256xf32>
      %c0_26 = arith.constant 0 : index
      %c0_27 = arith.constant 0 : index
      %31 = vector.load %arg7[%c0_26, %c0_27] : memref<128x256xf32, #tpu.memory_space<vmem>>, vector<128x256xf32>
      tpu.vector_store %arg7[%c0_26, %c0_27], %30 {strides = array<i32>} : memref<128x256xf32, #tpu.memory_space<vmem>>, vector<128x256xf32>,
      %32 = arith.subf %30, %3 : vector<128x256xf32>
      %33 = arith.mulf %32, %32 : vector<128x256xf32>
      %cst_28 = arith.constant dense<0.000000e+00> : vector<128xf32>
      %34 = vector.multi_reduction <add>, %33, %cst_28 [1] : vector<128x256xf32> to vector<128xf32>
      %35 = vector.shape_cast %34 : vector<128xf32> to vector<128x1xf32>
      %36 = arith.mulf %3, %3 : vector<128x256xf32>
      %cst_29 = arith.constant dense<0.000000e+00> : vector<128xf32>
      %37 = vector.multi_reduction <add>, %36, %cst_29 [1] : vector<128x256xf32> to vector<128xf32>
      %38 = vector.shape_cast %37 : vector<128xf32> to vector<128x1xf32>
      %39 = math.rsqrt %38 : vector<128x1xf32>
      %40 = arith.mulf %35, %39 : vector<128x1xf32>
      %41 = vector.shape_cast %40 : vector<128x1xf32> to vector<1x128x1xf32>
      %cst_30 = arith.constant dense<0.000000e+00> : vector<1xf32>
      %42 = vector.multi_reduction <add>, %41, %cst_30 [1, 2] : vector<1x128x1xf32> to vector<1xf32>
      %43 = vector.shape_cast %42 : vector<1xf32> to vector<1x1x1xf32>
      %44 = vector.extract %43[0, 0, 0] : f32 from vector<1x1x1xf32>
      %c0_31 = arith.constant 0 : index
      %c0_32 = arith.constant 0 : index
      %45 = vector.load %arg12[%c0_31, %c0_32] : memref<128x1xf32, #tpu.memory_space<vmem>>, vector<128x1xf32>
      %46 = vector.shape_cast %45 : vector<128x1xf32> to vector<1x128x1xf32>
      %cst_33 = arith.constant dense<0.000000e+00> : vector<1xf32>
      %47 = vector.multi_reduction <add>, %46, %cst_33 [1, 2] : vector<1x128x1xf32> to vector<1xf32>
      %48 = vector.shape_cast %47 : vector<1xf32> to vector<1x1x1xf32>
      %49 = vector.extract %48[0, 0, 0] : f32 from vector<1x1x1xf32>
      %50 = vector.broadcast %44 : f32 to vector<1x1x128xf32>
      %c0_34 = arith.constant 0 : index
      %c0_35 = arith.constant 0 : index
      %c0_36 = arith.constant 0 : index
      %51 = vector.load %arg9[%c0_34, %c0_35, %c0_36] : memref<1x1x128xf32, #tpu.memory_space<vmem>>, vector<1x1x128xf32>
      tpu.vector_store %arg9[%c0_34, %c0_35, %c0_36], %50 {strides = array<i32>} : memref<1x1x128xf32, #tpu.memory_space<vmem>>, vector<1x1x128xf32>,
      %52 = vector.broadcast %49 : f32 to vector<1x1x128xf32>
      %c0_37 = arith.constant 0 : index
      %c0_38 = arith.constant 0 : index
      %c0_39 = arith.constant 0 : index
      %53 = vector.load %arg10[%c0_37, %c0_38, %c0_39] : memref<1x1x128xf32, #tpu.memory_space<vmem>>, vector<1x1x128xf32>
      tpu.vector_store %arg10[%c0_37, %c0_38, %c0_39], %52 {strides = array<i32>} : memref<1x1x128xf32, #tpu.memory_space<vmem>>, vector<1x1x128xf32>,
    } else {
    }
    return
  }
  func.func @transform_0(%arg0: i32, %arg1: i32) -> (i32, i32) {
    %c0_i32 = arith.constant 0 : i32
    %c0_i32_0 = arith.constant 0 : i32
    return %arg0, %c0_i32 : i32, i32
  }
  func.func @transform_1(%arg0: i32, %arg1: i32) -> (i32, i32) {
    %c0_i32 = arith.constant 0 : i32
    %c0_i32_0 = arith.constant 0 : i32
    return %c0_i32, %arg1 : i32, i32
  }
  func.func @transform_2(%arg0: i32, %arg1: i32) -> (i32, i32) {
    %c0_i32 = arith.constant 0 : i32
    %c0_i32_0 = arith.constant 0 : i32
    return %c0_i32, %arg1 : i32, i32
  }
  func.func @transform_3(%arg0: i32, %arg1: i32) -> (i32, i32) {
    %c0_i32 = arith.constant 0 : i32
    %c0_i32_0 = arith.constant 0 : i32
    return %arg1, %c0_i32 : i32, i32
  }
  func.func @transform_4(%arg0: i32, %arg1: i32) -> (i32, i32) {
    %c0_i32 = arith.constant 0 : i32
    %c0_i32_0 = arith.constant 0 : i32
    %c0_i32_1 = arith.constant 0 : i32
    return %c0_i32, %c0_i32_0 : i32, i32
  }
  func.func @transform_5(%arg0: i32, %arg1: i32) -> (i32, i32) {
    %c0_i32 = arith.constant 0 : i32
    %c0_i32_0 = arith.constant 0 : i32
    return %arg0, %c0_i32 : i32, i32
  }
  func.func @transform_6(%arg0: i32, %arg1: i32) -> (i32, i32) {
    %c0_i32 = arith.constant 0 : i32
    return %arg0, %arg1 : i32, i32
  }
  func.func @transform_7(%arg0: i32, %arg1: i32) -> (i32, i32, i32) {
    %c0_i32 = arith.constant 0 : i32
    %c0_i32_0 = arith.constant 0 : i32
    %c0_i32_1 = arith.constant 0 : i32
    return %arg0, %c0_i32, %c0_i32_0 : i32, i32, i32
  }
  func.func @transform_8(%arg0: i32, %arg1: i32) -> (i32, i32, i32) {
    %c0_i32 = arith.constant 0 : i32
    %c0_i32_0 = arith.constant 0 : i32
    %c0_i32_1 = arith.constant 0 : i32
    return %arg0, %c0_i32, %c0_i32_0 : i32, i32, i32
  }
}

</mosaic_0001>

<llo_original>
// kernel: sub.1
$region0: #{sub.1}
  #allocation0 [shape = 's32[1]{0}', space=sflag, size = 0x4, scoped, tag = 'scoped memory for sub.1']
  %s0 = inlined_call_operand.vmem [shape: f32[512], index: 0, kind: input, shape index: {}]
  %s1 = inlined_call_operand.vmem [shape: f32[512], index: 1, kind: input, shape index: {}]
  %s2 = inlined_call_operand.vmem [shape: f32[512], index: 2, kind: output, shape index: {}]
  %v3 = vld [vmem:[%s0] sm:$0xf]
  %v4 = vld [vmem:[%s1] sm:$0xf]
  %5 = xla_tuple %v3, %v4
  %6 = xla_tuple %5
  %v7 = vsub.f32 %v3, %v4
  %8 = xla_tuple %v7
  %9 = vst [vmem:[%s2] sm:$0xf] %v7

// kernel: sae_forward.1
$region0: #{sae_forward.1}
  #allocation0 [shape = 'u32[]', space=smem, size = 0x4, offset = 0x4, fixed_abs, tag = 'smem constant byte address 0x4 - core index']
  #allocation1 [shape = 'u32[144,128]{1,0:T(1,128)}', space=vmem, size = 0x12000, scoped, tag = 'internal scratch']
  #allocation2 [shape = 'f32[128,256]{1,0:T(8,128)}', space=vmem, size = 0x20000, scoped, tag = 'scratch operand']
  #allocation3 [shape = 'f32[128,1]{1,0:T(8,128)}', space=vmem, size = 0x10000, scoped, tag = 'scratch operand']
  %s0 = inlined_call_operand.vmem [shape: f32[256,256], index: 0, kind: input, shape index: {}]
  %s1 = inlined_call_operand.vmem [shape: bf16[256,512], index: 1, kind: input, shape index: {}]
  %s2 = inlined_call_operand.vmem [shape: f32[1,512], index: 2, kind: input, shape index: {}]
  %s3 = inlined_call_operand.vmem [shape: bf16[512,256], index: 3, kind: input, shape index: {}]
  %s4 = inlined_call_operand.vmem [shape: f32[1,256], index: 4, kind: input, shape index: {}]
  %s5 = inlined_call_operand.hbm [shape: f32[256,256], index: 5, kind: output, shape index: {0}]
  %s6 = inlined_call_operand.hbm [shape: f32[256,512], index: 6, kind: output, shape index: {1}]
  %s7 = inlined_call_operand.vmem [shape: f32[2,1,128], index: 7, kind: output, shape index: {2}]
  %s8 = inlined_call_operand.vmem [shape: f32[2,1,128], index: 8, kind: output, shape index: {3}]
  %9 = xla_tuple %s5, %s6, %s7, %s8
  %s10 = sld [smem:[#allocation0]]
  $region123: #{sae_forward.1} parent=0
    _
  %s12 = ssub.s32 1, %s10
  %s13 = scalar_select 0, %s12, %s10
  $region1: #{sae_forward.1} parent=0
    #allocation4 [shape = 'u8[262144]{0}', space=vmem, size = 0x40000, scoped, tag = 'input window, operand 1']
    #allocation5 [shape = 'u8[262144]{0}', space=vmem, size = 0x40000, scoped, tag = 'output window, operand 0']
    #allocation6 [shape = 's32[2]{0}', space=sflag, size = 0x8, scoped, tag = 'scoped memory for sae_forward.1']
    #allocation7 [shape = 'u8[262144]{0}', space=vmem, size = 0x40000, scoped, tag = 'output window, operand 1']
    #allocation8 [shape = 's32[2]{0}', space=sflag, size = 0x8, scoped, tag = 'scoped memory for sae_forward.1']
    %14 = vsyncpa [#allocation6], 0
    %s15 = scalar_lea.sflag [#allocation6], 1
    %16 = vsyncpa %s15, 0
    %17 = vsyncpa [#allocation8], 0
    %s18 = scalar_lea.sflag [#allocation8], 1
    %19 = vsyncpa %s18, 0
    loop: start=0, step=1, limit=6
    $region2: #{sae_forward.1} parent=1 // loop_pre_header
      _
    $region3: #{sae_forward.1} parent=1 // loop_header
      %s21 = sphi 0, %s25
      %p22 = scmp.ge.s32.totalorder %s21, 6
      %s28 = sphi 0, %s40
      %s29 = sphi 0, %s36
      %s30 = sphi 0, %s28
      %s31 = sphi 0, %s29
      %s32 = sphi 0, %s30
      %s33 = sphi 0, %s31
      %s43 = sphi 0, %s45
      %s46 = sphi 0, %s43
      %s47 = sphi 0, %s46
      %s63 = sphi 0, %s47
      %s69 = sphi 0, %s71
      %s72 = sphi 0, %s69
      %s73 = sphi 0, %s72
      %s89 = sphi 0, %s73
      %s95 = sphi 0, %s97
      %s98 = sphi 0, %s95
      %s99 = sphi 0, %s98
      %s115 = sphi 0, %s99
      %s121 = sphi 0, %s123
      %s124 = sphi 0, %s121
      %s125 = sphi 0, %s124
      %s141 = sphi 0, %s125
      %s145 = sphi 0, %s145
      %s147 = sphi 0, %s145
      %s148 = sphi 0, %s147
      %s162 = sphi 0, %s148
      %s168 = sphi 0, %s170
      %s171 = sphi 0, %s168
      %s172 = sphi 0, %s171
      %s188 = sphi 0, %s172
      %s196 = sphi 0, %s198
      %s199 = sphi 0, %s196
      %s200 = sphi 0, %s199
      %s216 = sphi 0, %s200
      %s222 = sphi 0, %s224
      %s225 = sphi 0, %s222
      %s226 = sphi 0, %s225
      %s242 = sphi 0, %s226
      %s248 = sphi 0, %s250
      %s251 = sphi 0, %s248
      %s252 = sphi 0, %s251
      %s268 = sphi 0, %s252
    $region4: #{sae_forward.1} parent=1 // loop_header_branch
      %24 = sbr.rel (%p22) target = $region8
    $region5: #{sae_forward.1} parent=1 // loop_body
      %s26 = ssub.s32 %s21, 1
      %s27 = ssub.s32 %s21, 2
      %s34 = sadd.s32 1, %s29
      %p35 = scmp.ge.s32.totalorder %s34, 2
      %s36 = scalar_select %p35, 0, %s34
      %s37 = sadd.s32 1, %s28
      %s38 = scalar_select %p35, %s37, %s28
      %p39 = scmp.ge.s32.totalorder %s38, 2
      %s40 = scalar_select %p39, 0, %s38
      %s41 = ssub.s32 %s28, %s40
      %p42 = scmp.eq.s32.totalorder %s41, 0
      %s44 = sadd.s32 %s43, 1
      %s45 = scalar_select %p42, %s43, %s44
      %p48 = pneg %p42
      %p49 = scmp.eq.s32.totalorder %s21, 3
      %p50 = por %p48, %p49
      %p51 = scmp.ne.s32.totalorder %s43, %s46
      %p52 = scmp.eq.s32.totalorder %s21, 0
      %p53 = por %p51, %p52
      %p54 = scmp.ne.s32.totalorder %s43, %s46
      %p55 = scmp.eq.s32.totalorder %s26, 3
      %p56 = por %p54, %p55
      %p57 = scmp.ne.s32.totalorder %s46, %s47
      %p58 = scmp.eq.s32.totalorder %s26, 0
      %p59 = por %p57, %p58
      %p60 = scmp.ne.s32.totalorder %s46, %s47
      %p61 = scmp.eq.s32.totalorder %s27, 3
      %p62 = por %p60, %p61
      %p64 = scmp.ne.s32.totalorder %s47, %s63
      %p65 = scmp.eq.s32.totalorder %s27, 0
      %p66 = por %p64, %p65
      %s67 = ssub.s32 %s29, %s36
      %p68 = scmp.eq.s32.totalorder %s67, 0
      %s70 = sadd.s32 %s69, 1
      %s71 = scalar_select %p68, %s69, %s70
      %p74 = pneg %p68
      %p75 = scmp.eq.s32.totalorder %s21, 3
      %p76 = por %p74, %p75
      %p77 = scmp.ne.s32.totalorder %s69, %s72
      %p78 = scmp.eq.s32.totalorder %s21, 0
      %p79 = por %p77, %p78
      %p80 = scmp.ne.s32.totalorder %s69, %s72
      %p81 = scmp.eq.s32.totalorder %s26, 3
      %p82 = por %p80, %p81
      %p83 = scmp.ne.s32.totalorder %s72, %s73
      %p84 = scmp.eq.s32.totalorder %s26, 0
      %p85 = por %p83, %p84
      %p86 = scmp.ne.s32.totalorder %s72, %s73
      %p87 = scmp.eq.s32.totalorder %s27, 3
      %p88 = por %p86, %p87
      %p90 = scmp.ne.s32.totalorder %s73, %s89
      %p91 = scmp.eq.s32.totalorder %s27, 0
      %p92 = por %p90, %p91
      %s93 = ssub.s32 %s29, %s36
      %p94 = scmp.eq.s32.totalorder %s93, 0
      %s96 = sadd.s32 %s95, 1
      %s97 = scalar_select %p94, %s95, %s96
      %p100 = pneg %p94
      %p101 = scmp.eq.s32.totalorder %s21, 3
      %p102 = por %p100, %p101
      %p103 = scmp.ne.s32.totalorder %s95, %s98
      %p104 = scmp.eq.s32.totalorder %s21, 0
      %p105 = por %p103, %p104
      %p106 = scmp.ne.s32.totalorder %s95, %s98
      %p107 = scmp.eq.s32.totalorder %s26, 3
      %p108 = por %p106, %p107
      %p109 = scmp.ne.s32.totalorder %s98, %s99
      %p110 = scmp.eq.s32.totalorder %s26, 0
      %p111 = por %p109, %p110
      %p112 = scmp.ne.s32.totalorder %s98, %s99
      %p113 = scmp.eq.s32.totalorder %s27, 3
      %p114 = por %p112, %p113
      %p116 = scmp.ne.s32.totalorder %s99, %s115
      %p117 = scmp.eq.s32.totalorder %s27, 0
      %p118 = por %p116, %p117
      %s119 = ssub.s32 %s29, %s36
      %p120 = scmp.eq.s32.totalorder %s119, 0
      %s122 = sadd.s32 %s121, 1
      %s123 = scalar_select %p120, %s121, %s122
      %p126 = pneg %p120
      %p127 = scmp.eq.s32.totalorder %s21, 3
      %p128 = por %p126, %p127
      %p129 = scmp.ne.s32.totalorder %s121, %s124
      %p130 = scmp.eq.s32.totalorder %s21, 0
      %p131 = por %p129, %p130
      %p132 = scmp.ne.s32.totalorder %s121, %s124
      %p133 = scmp.eq.s32.totalorder %s26, 3
      %p134 = por %p132, %p133
      %p135 = scmp.ne.s32.totalorder %s124, %s125
      %p136 = scmp.eq.s32.totalorder %s26, 0
      %p137 = por %p135, %p136
      %p138 = scmp.ne.s32.totalorder %s124, %s125
      %p139 = scmp.eq.s32.totalorder %s27, 3
      %p140 = por %p138, %p139
      %p142 = scmp.ne.s32.totalorder %s125, %s141
      %p143 = scmp.eq.s32.totalorder %s27, 0
      %p144 = por %p142, %p143
      %s146 = sadd.s32 %s145, 1
      %p149 = scmp.eq.s32.totalorder %s21, 3
      %p150 = scmp.ne.s32.totalorder %s145, %s147
      %p151 = scmp.eq.s32.totalorder %s21, 0
      %p152 = por %p150, %p151
      %p153 = scmp.ne.s32.totalorder %s145, %s147
      %p154 = scmp.eq.s32.totalorder %s26, 3
      %p155 = por %p153, %p154
      %p156 = scmp.ne.s32.totalorder %s147, %s148
      %p157 = scmp.eq.s32.totalorder %s26, 0
      %p158 = por %p156, %p157
      %p159 = scmp.ne.s32.totalorder %s147, %s148
      %p160 = scmp.eq.s32.totalorder %s27, 3
      %p161 = por %p159, %p160
      %p163 = scmp.ne.s32.totalorder %s148, %s162
      %p164 = scmp.eq.s32.totalorder %s27, 0
      %p165 = por %p163, %p164
      %s166 = ssub.s32 %s28, %s40
      %p167 = scmp.eq.s32.totalorder %s166, 0
      %s169 = sadd.s32 %s168, 1
      %s170 = scalar_select %p167, %s168, %s169
      %p173 = pneg %p167
      %p174 = scmp.eq.s32.totalorder %s21, 3
      %p175 = por %p173, %p174
      %p176 = scmp.ne.s32.totalorder %s168, %s171
      %p177 = scmp.eq.s32.totalorder %s21, 0
      %p178 = por %p176, %p177
      %p179 = scmp.ne.s32.totalorder %s168, %s171
      %p180 = scmp.eq.s32.totalorder %s26, 3
      %p181 = por %p179, %p180
      %p182 = scmp.ne.s32.totalorder %s171, %s172
      %p183 = scmp.eq.s32.totalorder %s26, 0
      %p184 = por %p182, %p183
      %p185 = scmp.ne.s32.totalorder %s171, %s172
      %p186 = scmp.eq.s32.totalorder %s27, 3
      %p187 = por %p185, %p186
      %p189 = scmp.ne.s32.totalorder %s172, %s188
      %p190 = scmp.eq.s32.totalorder %s27, 0
      %p191 = por %p189, %p190
      %s192 = ssub.s32 %s28, %s40
      %s193 = ssub.s32 %s29, %s36
      %s194 = sor.u32 %s192, %s193
      %p195 = scmp.eq.s32.totalorder %s194, 0
      %s197 = sadd.s32 %s196, 1
      %s198 = scalar_select %p195, %s196, %s197
      %p201 = pneg %p195
      %p202 = scmp.eq.s32.totalorder %s21, 3
      %p203 = por %p201, %p202
      %p204 = scmp.ne.s32.totalorder %s196, %s199
      %p205 = scmp.eq.s32.totalorder %s21, 0
      %p206 = por %p204, %p205
      %p207 = scmp.ne.s32.totalorder %s196, %s199
      %p208 = scmp.eq.s32.totalorder %s26, 3
      %p209 = por %p207, %p208
      %p210 = scmp.ne.s32.totalorder %s199, %s200
      %p211 = scmp.eq.s32.totalorder %s26, 0
      %p212 = por %p210, %p211
      %p213 = scmp.ne.s32.totalorder %s199, %s200
      %p214 = scmp.eq.s32.totalorder %s27, 3
      %p215 = por %p213, %p214
      %p217 = scmp.ne.s32.totalorder %s200, %s216
      %p218 = scmp.eq.s32.totalorder %s27, 0
      %p219 = por %p217, %p218
      %s220 = ssub.s32 %s28, %s40
      %p221 = scmp.eq.s32.totalorder %s220, 0
      %s223 = sadd.s32 %s222, 1
      %s224 = scalar_select %p221, %s222, %s223
      %p227 = pneg %p221
      %p228 = scmp.eq.s32.totalorder %s21, 3
      %p229 = por %p227, %p228
      %p230 = scmp.ne.s32.totalorder %s222, %s225
      %p231 = scmp.eq.s32.totalorder %s21, 0
      %p232 = por %p230, %p231
      %p233 = scmp.ne.s32.totalorder %s222, %s225
      %p234 = scmp.eq.s32.totalorder %s26, 3
      %p235 = por %p233, %p234
      %p236 = scmp.ne.s32.totalorder %s225, %s226
      %p237 = scmp.eq.s32.totalorder %s26, 0
      %p238 = por %p236, %p237
      %p239 = scmp.ne.s32.totalorder %s225, %s226
      %p240 = scmp.eq.s32.totalorder %s27, 3
      %p241 = por %p239, %p240
      %p243 = scmp.ne.s32.totalorder %s226, %s242
      %p244 = scmp.eq.s32.totalorder %s27, 0
      %p245 = por %p243, %p244
      %s246 = ssub.s32 %s28, %s40
      %p247 = scmp.eq.s32.totalorder %s246, 0
      %s249 = sadd.s32 %s248, 1
      %s250 = scalar_select %p247, %s248, %s249
      %p253 = pneg %p247
      %p254 = scmp.eq.s32.totalorder %s21, 3
      %p255 = por %p253, %p254
      %p256 = scmp.ne.s32.totalorder %s248, %s251
      %p257 = scmp.eq.s32.totalorder %s21, 0
      %p258 = por %p256, %p257
      %p259 = scmp.ne.s32.totalorder %s248, %s251
      %p260 = scmp.eq.s32.totalorder %s26, 3
      %p261 = por %p259, %p260
      %p262 = scmp.ne.s32.totalorder %s251, %s252
      %p263 = scmp.eq.s32.totalorder %s26, 0
      %p264 = por %p262, %p263
      %p265 = scmp.ne.s32.totalorder %s251, %s252
      %p266 = scmp.eq.s32.totalorder %s27, 3
      %p267 = por %p265, %p266
      %p269 = scmp.ne.s32.totalorder %s252, %s268
      %p270 = scmp.eq.s32.totalorder %s27, 0
      %p271 = por %p269, %p270
      %p272 = scmp.le.s32.totalorder 1, %s21
      %p273 = scmp.lt.s32.totalorder %s21, 5
      %p274 = pnand %p272, %p273
      %p275 = pneg %p274
      // Predicated region
      $region9: #{sae_forward.1} parent=5 // pred_check
        _
      $region10: #{sae_forward.1} parent=5 // pred_check_branch
        %277 = sbr.rel (%p274) target = $region12
      $region11: #{sae_forward.1} parent=5 // pred_region
        %s278 = ssub.s32 %s21, 1
        // Predicated region
        $region13: #{sae_forward.1} parent=11 // pred_check
          %p279 = pneg %p158
        $region14: #{sae_forward.1} parent=11 // pred_check_branch
          %281 = sbr.rel (%p279) target = $region16
        $region15: #{sae_forward.1} parent=11 // pred_region
          _
        $region16: #{sae_forward.1} parent=11 // pred_fallthru
          _
      $region12: #{sae_forward.1} parent=5 // pred_fallthru
        _
      %p282 = scmp.lt.s32.totalorder %s21, 4
      // Predicated region
      $region17: #{sae_forward.1} parent=5 // pred_check
        %p283 = pneg %p282
      $region18: #{sae_forward.1} parent=5 // pred_check_branch
        %285 = sbr.rel (%p283) target = $region20
      $region19: #{sae_forward.1} parent=5 // pred_region
        // Predicated region
        $region21: #{sae_forward.1} parent=19 // pred_check
          %p286 = pneg %p53
        $region22: #{sae_forward.1} parent=19 // pred_check_branch
          %288 = sbr.rel (%p286) target = $region24
        $region23: #{sae_forward.1} parent=19 // pred_region
          %s289 = smul.u32 16, %s28
          %p290 = scmp.lt.s32.totalorder %s289, 31
          %s291 = scalar_select %p290, %s289, 31
          %s292 = smul.addr %s291, 2
          %s293 = smul.addr %s292, 8
          %s294 = scalar_lea.vmem %s0, %s293
          %s295 = smul.u32 16, %s28
        $region24: #{sae_forward.1} parent=19 // pred_fallthru
          _
        // Predicated region
        $region25: #{sae_forward.1} parent=19 // pred_check
          %p296 = pneg %p79
        $region26: #{sae_forward.1} parent=19 // pred_check_branch
          %298 = sbr.rel (%p296) target = $region28
        $region27: #{sae_forward.1} parent=19 // pred_region
          %s299 = sand.u32 %s69, 1
          %s300 = sand.u32 %s69, 1
          %s301 = smul.addr %s300, 256
          %s302 = scalar_lea.vmem [#allocation4], %s301
          %s303 = smul.u32 2, %s29
          %s304 = smul.addr %s303, 4
          %s305 = scalar_lea.vmem %s1, %s304
          // Predicated region
          $region29: #{sae_forward.1} parent=27 // pred_check
            _
          $region30: #{sae_forward.1} parent=27 // pred_check_branch
            %307 = sbr.rel (0) target = $region32
          $region31: #{sae_forward.1} parent=27 // pred_region
            // Predicated region
            $region33: #{sae_forward.1} parent=31 // pred_check
              _
            $region34: #{sae_forward.1} parent=31 // pred_check_branch
              %309 = sbr.rel (0) target = $region36
            $region35: #{sae_forward.1} parent=31 // pred_region
              // Predicated region
              $region48: #{sae_forward.1} parent=35 // pred_check
                _
              $region49: #{sae_forward.1} parent=35 // pred_check_branch
                %387 = sbr.rel (0) target = $region51
              $region50: #{sae_forward.1} parent=35 // pred_region
                loop: start=0, step=1, limit=1
                $region52: #{sae_forward.1} parent=50 // loop_pre_header
                  _
                $region53: #{sae_forward.1} parent=50 // loop_header
                  %s389 = sphi 0, %s393
                  %p390 = scmp.ge.s32.totalorder %s389, 1
                  %s394 = sphi %s305, %s305
                  %s395 = sphi %s302, %s302
                $region54: #{sae_forward.1} parent=50 // loop_header_branch
                  %392 = sbr.rel (%p390) target = $region58
                $region55: #{sae_forward.1} parent=50 // loop_body
                  %v396 = vld [vmem:[%s394] sm:$0xff]
                  %397 = vst [vmem:[%s395] sm:$0xff] %v396
                  %v398 = vld [vmem:[%s394 + $0x10] sm:$0xff]
                  %399 = vst [vmem:[%s395 + $0x8] sm:$0xff] %v398
                  %v400 = vld [vmem:[%s394 + $0x20] sm:$0xff]
                  %401 = vst [vmem:[%s395 + $0x10] sm:$0xff] %v400
                  %v402 = vld [vmem:[%s394 + $0x30] sm:$0xff]
                  %403 = vst [vmem:[%s395 + $0x18] sm:$0xff] %v402
                  %v404 = vld [vmem:[%s394 + $0x40] sm:$0xff]
                  %405 = vst [vmem:[%s395 + $0x20] sm:$0xff] %v404
                  %v406 = vld [vmem:[%s394 + $0x50] sm:$0xff]
                  %407 = vst [vmem:[%s395 + $0x28] sm:$0xff] %v406
                  %v408 = vld [vmem:[%s394 + $0x60] sm:$0xff]
                  %409 = vst [vmem:[%s395 + $0x30] sm:$0xff] %v408
                  %v410 = vld [vmem:[%s394 + $0x70] sm:$0xff]
                  %411 = vst [vmem:[%s395 + $0x38] sm:$0xff] %v410
                  %v412 = vld [vmem:[%s394 + $0x80] sm:$0xff]
                  %413 = vst [vmem:[%s395 + $0x40] sm:$0xff] %v412
                  %v414 = vld [vmem:[%s394 + $0x90] sm:$0xff]
                  %415 = vst [vmem:[%s395 + $0x48] sm:$0xff] %v414
                  %v416 = vld [vmem:[%s394 + $0xa0] sm:$0xff]
                  %417 = vst [vmem:[%s395 + $0x50] sm:$0xff] %v416
                  %v418 = vld [vmem:[%s394 + $0xb0] sm:$0xff]
                  %419 = vst [vmem:[%s395 + $0x58] sm:$0xff] %v418
                  %v420 = vld [vmem:[%s394 + $0xc0] sm:$0xff]
                  %421 = vst [vmem:[%s395 + $0x60] sm:$0xff] %v420
                  %v422 = vld [vmem:[%s394 + $0xd0] sm:$0xff]
                  %423 = vst [vmem:[%s395 + $0x68] sm:$0xff] %v422
                  %v424 = vld [vmem:[%s394 + $0xe0] sm:$0xff]
                  %425 = vst [vmem:[%s395 + $0x70] sm:$0xff] %v424
                  %v426 = vld [vmem:[%s394 + $0xf0] sm:$0xff]
                  %427 = vst [vmem:[%s395 + $0x78] sm:$0xff] %v426
                  %v428 = vld [vmem:[%s394 + $0x100] sm:$0xff]
                  %429 = vst [vmem:[%s395 + $0x80] sm:$0xff] %v428
                  %v430 = vld [vmem:[%s394 + $0x110] sm:$0xff]
                  %431 = vst [vmem:[%s395 + $0x88] sm:$0xff] %v430
                  %v432 = vld [vmem:[%s394 + $0x120] sm:$0xff]
                  %433 = vst [vmem:[%s395 + $0x90] sm:$0xff] %v432
                  %v434 = vld [vmem:[%s394 + $0x130] sm:$0xff]
                  %435 = vst [vmem:[%s395 + $0x98] sm:$0xff] %v434
                  %v436 = vld [vmem:[%s394 + $0x140] sm:$0xff]
                  %437 = vst [vmem:[%s395 + $0xa0] sm:$0xff] %v436
                  %v438 = vld [vmem:[%s394 + $0x150] sm:$0xff]
                  %439 = vst [vmem:[%s395 + $0xa8] sm:$0xff] %v438
                  %v440 = vld [vmem:[%s394 + $0x160] sm:$0xff]
                  %441 = vst [vmem:[%s395 + $0xb0] sm:$0xff] %v440
                  %v442 = vld [vmem:[%s394 + $0x170] sm:$0xff]
                  %443 = vst [vmem:[%s395 + $0xb8] sm:$0xff] %v442
                  %v444 = vld [vmem:[%s394 + $0x180] sm:$0xff]
                  %445 = vst [vmem:[%s395 + $0xc0] sm:$0xff] %v444
                  %v446 = vld [vmem:[%s394 + $0x190] sm:$0xff]
                  %447 = vst [vmem:[%s395 + $0xc8] sm:$0xff] %v446
                  %v448 = vld [vmem:[%s394 + $0x1a0] sm:$0xff]
                  %449 = vst [vmem:[%s395 + $0xd0] sm:$0xff] %v448
                  %v450 = vld [vmem:[%s394 + $0x1b0] sm:$0xff]
                  %451 = vst [vmem:[%s395 + $0xd8] sm:$0xff] %v450
                  %v452 = vld [vmem:[%s394 + $0x1c0] sm:$0xff]
                  %453 = vst [vmem:[%s395 + $0xe0] sm:$0xff] %v452
                  %v454 = vld [vmem:[%s394 + $0x1d0] sm:$0xff]
                  %455 = vst [vmem:[%s395 + $0xe8] sm:$0xff] %v454
                  %v456 = vld [vmem:[%s394 + $0x1e0] sm:$0xff]
                  %457 = vst [vmem:[%s395 + $0xf0] sm:$0xff] %v456
                  %v458 = vld [vmem:[%s394 + $0x1f0] sm:$0xff]
                  %459 = vst [vmem:[%s395 + $0xf8] sm:$0xff] %v458
                $region56: #{sae_forward.1} parent=50 // loop_footer
                  %s393 = sadd.s32 1, %s389
                $region57: #{sae_forward.1} parent=50 // loop_footer_branch
                  %388 = sbr.rel target = $region53
                $region58: #{sae_forward.1} parent=50 // loop_exit
                  _
              $region51: #{sae_forward.1} parent=35 // pred_fallthru
                _
              // Predicated region
              $region59: #{sae_forward.1} parent=35 // pred_check
                _
              $region60: #{sae_forward.1} parent=35 // pred_check_branch
                %461 = sbr.rel target = $region62
              $region61: #{sae_forward.1} parent=35 // pred_region
                _
              $region62: #{sae_forward.1} parent=35 // pred_fallthru
                _
            $region36: #{sae_forward.1} parent=31 // pred_fallthru
              _
            // Predicated region
            $region37: #{sae_forward.1} parent=31 // pred_check
              _
            $region38: #{sae_forward.1} parent=31 // pred_check_branch
              %311 = sbr.rel target = $region40
            $region39: #{sae_forward.1} parent=31 // pred_region
              %s313 = ssub.s32 256, 1
              loop: start=0, step=1, limit=1
              $region41: #{sae_forward.1} parent=39 // loop_pre_header
                _
              $region42: #{sae_forward.1} parent=39 // loop_header
                %s315 = sphi 0, %s319
                %p316 = scmp.ge.s32.totalorder %s315, 1
                %s320 = sphi %s305, %s305
                %s321 = sphi %s302, %s302
              $region43: #{sae_forward.1} parent=39 // loop_header_branch
                %318 = sbr.rel (%p316) target = $region47
              $region44: #{sae_forward.1} parent=39 // loop_body
                %v322 = vld [vmem:[%s320] sm:%s313]
                %323 = vst [vmem:[%s321] sm:%s313] %v322
                %v324 = vld [vmem:[%s320 + $0x10] sm:%s313]
                %325 = vst [vmem:[%s321 + $0x8] sm:%s313] %v324
                %v326 = vld [vmem:[%s320 + $0x20] sm:%s313]
                %327 = vst [vmem:[%s321 + $0x10] sm:%s313] %v326
                %v328 = vld [vmem:[%s320 + $0x30] sm:%s313]
                %329 = vst [vmem:[%s321 + $0x18] sm:%s313] %v328
                %v330 = vld [vmem:[%s320 + $0x40] sm:%s313]
                %331 = vst [vmem:[%s321 + $0x20] sm:%s313] %v330
                %v332 = vld [vmem:[%s320 + $0x50] sm:%s313]
                %333 = vst [vmem:[%s321 + $0x28] sm:%s313] %v332
                %v334 = vld [vmem:[%s320 + $0x60] sm:%s313]
                %335 = vst [vmem:[%s321 + $0x30] sm:%s313] %v334
                %v336 = vld [vmem:[%s320 + $0x70] sm:%s313]
                %337 = vst [vmem:[%s321 + $0x38] sm:%s313] %v336
                %v338 = vld [vmem:[%s320 + $0x80] sm:%s313]
                %339 = vst [vmem:[%s321 + $0x40] sm:%s313] %v338
                %v340 = vld [vmem:[%s320 + $0x90] sm:%s313]
                %341 = vst [vmem:[%s321 + $0x48] sm:%s313] %v340
                %v342 = vld [vmem:[%s320 + $0xa0] sm:%s313]
                %343 = vst [vmem:[%s321 + $0x50] sm:%s313] %v342
                %v344 = vld [vmem:[%s320 + $0xb0] sm:%s313]
                %345 = vst [vmem:[%s321 + $0x58] sm:%s313] %v344
                %v346 = vld [vmem:[%s320 + $0xc0] sm:%s313]
                %347 = vst [vmem:[%s321 + $0x60] sm:%s313] %v346
                %v348 = vld [vmem:[%s320 + $0xd0] sm:%s313]
                %349 = vst [vmem:[%s321 + $0x68] sm:%s313] %v348
                %v350 = vld [vmem:[%s320 + $0xe0] sm:%s313]
                %351 = vst [vmem:[%s321 + $0x70] sm:%s313] %v350
                %v352 = vld [vmem:[%s320 + $0xf0] sm:%s313]
                %353 = vst [vmem:[%s321 + $0x78] sm:%s313] %v352
                %v354 = vld [vmem:[%s320 + $0x100] sm:%s313]
                %355 = vst [vmem:[%s321 + $0x80] sm:%s313] %v354
                %v356 = vld [vmem:[%s320 + $0x110] sm:%s313]
                %357 = vst [vmem:[%s321 + $0x88] sm:%s313] %v356
                %v358 = vld [vmem:[%s320 + $0x120] sm:%s313]
                %359 = vst [vmem:[%s321 + $0x90] sm:%s313] %v358
                %v360 = vld [vmem:[%s320 + $0x130] sm:%s313]
                %361 = vst [vmem:[%s321 + $0x98] sm:%s313] %v360
                %v362 = vld [vmem:[%s320 + $0x140] sm:%s313]
                %363 = vst [vmem:[%s321 + $0xa0] sm:%s313] %v362
                %v364 = vld [vmem:[%s320 + $0x150] sm:%s313]
                %365 = vst [vmem:[%s321 + $0xa8] sm:%s313] %v364
                %v366 = vld [vmem:[%s320 + $0x160] sm:%s313]
                %367 = vst [vmem:[%s321 + $0xb0] sm:%s313] %v366
                %v368 = vld [vmem:[%s320 + $0x170] sm:%s313]
                %369 = vst [vmem:[%s321 + $0xb8] sm:%s313] %v368
                %v370 = vld [vmem:[%s320 + $0x180] sm:%s313]
                %371 = vst [vmem:[%s321 + $0xc0] sm:%s313] %v370
                %v372 = vld [vmem:[%s320 + $0x190] sm:%s313]
                %373 = vst [vmem:[%s321 + $0xc8] sm:%s313] %v372
                %v374 = vld [vmem:[%s320 + $0x1a0] sm:%s313]
                %375 = vst [vmem:[%s321 + $0xd0] sm:%s313] %v374
                %v376 = vld [vmem:[%s320 + $0x1b0] sm:%s313]
                %377 = vst [vmem:[%s321 + $0xd8] sm:%s313] %v376
                %v378 = vld [vmem:[%s320 + $0x1c0] sm:%s313]
                %379 = vst [vmem:[%s321 + $0xe0] sm:%s313] %v378
                %v380 = vld [vmem:[%s320 + $0x1d0] sm:%s313]
                %381 = vst [vmem:[%s321 + $0xe8] sm:%s313] %v380
                %v382 = vld [vmem:[%s320 + $0x1e0] sm:%s313]
                %383 = vst [vmem:[%s321 + $0xf0] sm:%s313] %v382
                %v384 = vld [vmem:[%s320 + $0x1f0] sm:%s313]
                %385 = vst [vmem:[%s321 + $0xf8] sm:%s313] %v384
              $region45: #{sae_forward.1} parent=39 // loop_footer
                %s319 = sadd.s32 1, %s315
              $region46: #{sae_forward.1} parent=39 // loop_footer_branch
                %314 = sbr.rel target = $region42
              $region47: #{sae_forward.1} parent=39 // loop_exit
                _
            $region40: #{sae_forward.1} parent=31 // pred_fallthru
              _
          $region32: #{sae_forward.1} parent=27 // pred_fallthru
            _
          %462 = vnop
        $region28: #{sae_forward.1} parent=19 // pred_fallthru
          _
        // Predicated region
        $region63: #{sae_forward.1} parent=19 // pred_check
          %p463 = pneg %p105
        $region64: #{sae_forward.1} parent=19 // pred_check_branch
          %465 = sbr.rel (%p463) target = $region66
        $region65: #{sae_forward.1} parent=19 // pred_region
          %s466 = smul.u32 2, %s29
          %p467 = scmp.lt.s32.totalorder %s466, 3
          %s468 = scalar_select %p467, %s466, 3
          %s469 = scalar_lea.vmem %s2, %s468
          %s470 = smul.u32 2, %s29
        $region66: #{sae_forward.1} parent=19 // pred_fallthru
          _
        // Predicated region
        $region67: #{sae_forward.1} parent=19 // pred_check
          %p471 = pneg %p131
        $region68: #{sae_forward.1} parent=19 // pred_check_branch
          %473 = sbr.rel (%p471) target = $region70
        $region69: #{sae_forward.1} parent=19 // pred_region
          %s474 = smul.u32 32, %s29
          %p475 = scmp.lt.s32.totalorder %s474, 63
          %s476 = scalar_select %p475, %s474, 63
          %s477 = smul.addr %s476, 2
          %s478 = smul.addr %s477, 4
          %s479 = scalar_lea.vmem %s3, %s478
          %s480 = smul.u32 32, %s29
        $region70: #{sae_forward.1} parent=19 // pred_fallthru
          _
      $region20: #{sae_forward.1} parent=5 // pred_fallthru
        _
      %p481 = scmp.le.s32.totalorder 1, %s21
      %p482 = scmp.lt.s32.totalorder %s21, 5
      %p483 = pnand %p481, %p482
      %p484 = pneg %p483
      // Predicated region
      $region71: #{sae_forward.1} parent=5 // pred_check
        _
      $region72: #{sae_forward.1} parent=5 // pred_check_branch
        %486 = sbr.rel (%p483) target = $region74
      $region73: #{sae_forward.1} parent=5 // pred_region
        %s487 = ssub.s32 %s21, 1
        %s488 = sand.u32 %s72, 1
        %s489 = sand.u32 %s72, 1
        %s490 = smul.addr %s489, 256
        %s491 = scalar_lea.vmem [#allocation4], %s490
        // Predicated region
        $region75: #{sae_forward.1} parent=73 // pred_check
          %p492 = pneg %p85
        $region76: #{sae_forward.1} parent=73 // pred_check_branch
          %494 = sbr.rel (%p492) target = $region78
        $region77: #{sae_forward.1} parent=73 // pred_region
          _
        $region78: #{sae_forward.1} parent=73 // pred_fallthru
          _
        %s495 = smul.u32 16, %s30
        %p496 = scmp.lt.s32.totalorder %s495, 31
        %s497 = scalar_select %p496, %s495, 31
        %s498 = smul.addr %s497, 2
        %s499 = smul.addr %s498, 8
        %s500 = scalar_lea.vmem %s0, %s499
        %p501 = pneg %p59
        %p502 = pneg %p56
        %s503 = sand.u32 %s72, 1
        %s504 = sand.u32 %s72, 1
        %s505 = smul.addr %s504, 256
        %s506 = scalar_lea.vmem [#allocation4], %s505
        %p507 = pneg %p85
        %p508 = pneg %p82
        %s509 = smul.u32 2, %s31
        %p510 = scmp.lt.s32.totalorder %s509, 3
        %s511 = scalar_select %p510, %s509, 3
        %s512 = scalar_lea.vmem %s2, %s511
        %p513 = pneg %p111
        %p514 = pneg %p108
        %s515 = smul.u32 32, %s31
        %p516 = scmp.lt.s32.totalorder %s515, 63
        %s517 = scalar_select %p516, %s515, 63
        %s518 = smul.addr %s517, 2
        %s519 = smul.addr %s518, 4
        %s520 = scalar_lea.vmem %s3, %s519
        %p521 = pneg %p137
        %p522 = pneg %p134
        %p523 = pneg %p158
        %p524 = pneg %p155
        %p525 = pneg %p184
        %p526 = pneg %p181
        %s527 = sand.u32 %s171, 1
        %s528 = scalar_lea.sflag [#allocation6], %s527
        %s529 = sand.u32 %s171, 1
        %s530 = smul.addr %s529, 256
        %s531 = scalar_lea.vmem [#allocation5], %s530
        %p532 = pneg %p212
        %p533 = pneg %p209
        %s534 = sand.u32 %s199, 1
        %s535 = scalar_lea.sflag [#allocation8], %s534
        %s536 = sand.u32 %s199, 1
        %s537 = smul.addr %s536, 256
        %s538 = scalar_lea.vmem [#allocation7], %s537
        %p539 = pneg %p238
        %p540 = pneg %p235
        %p541 = scmp.lt.s32.totalorder %s30, 1
        %s542 = scalar_select %p541, %s30, 1
        %s543 = scalar_lea.vmem %s7, %s542
        %p544 = pneg %p264
        %p545 = pneg %p261
        %p546 = scmp.lt.s32.totalorder %s30, 1
        %s547 = scalar_select %p546, %s30, 1
        %s548 = scalar_lea.vmem %s8, %s547
        %s549 = smul.u32 16, %s30
        %p550 = scmp.lt.s32.totalorder %s549, 31
        %s551 = scalar_select %p550, %s549, 31
        %s552 = smul.addr %s551, 2
        %s553 = smul.addr %s552, 8
        %s554 = scalar_lea.vmem %s0, %s553
        %s555 = smul.u32 16, %s30
        %s556 = smul.u32 2, %s31
        %s557 = smul.u32 2, %s31
        %p558 = scmp.lt.s32.totalorder %s557, 3
        %s559 = scalar_select %p558, %s557, 3
        %s560 = scalar_lea.vmem %s2, %s559
        %s561 = smul.u32 2, %s31
        %s562 = smul.u32 32, %s31
        %p563 = scmp.lt.s32.totalorder %s562, 63
        %s564 = scalar_select %p563, %s562, 63
        %s565 = smul.addr %s564, 2
        %s566 = smul.addr %s565, 4
        %s567 = scalar_lea.vmem %s3, %s566
        %s568 = smul.u32 32, %s31
        %s569 = smul.u32 16, %s30
        %s570 = smul.u32 16, %s30
        %s571 = smul.u32 2, %s31
        %p572 = scmp.lt.s32.totalorder %s30, 1
        %s573 = scalar_select %p572, %s30, 1
        %s574 = scalar_lea.vmem %s7, %s573
        %p575 = scmp.lt.s32.totalorder %s30, 1
        %s576 = scalar_select %p575, %s30, 1
        %s577 = scalar_lea.vmem %s8, %s576
        %p578 = scmp.eq.s32.totalorder %s31, 0
        // Predicated region
        $region79: #{sae_forward.1} parent=73 // pred_check
          %p579 = pneg %p578
        $region80: #{sae_forward.1} parent=73 // pred_check_branch
          %581 = sbr.rel (%p579) target = $region82
        $region81: #{sae_forward.1} parent=73 // pred_region
          %582 = vst [vmem:[#allocation2] sm:$0xff] 0.0
          %583 = vst [vmem:[#allocation2 + $0x8] sm:$0xff] 0.0
          %584 = vst [vmem:[#allocation2 + $0x10] sm:$0xff] 0.0
          %585 = vst [vmem:[#allocation2 + $0x18] sm:$0xff] 0.0
          %586 = vst [vmem:[#allocation2 + $0x20] sm:$0xff] 0.0
          %587 = vst [vmem:[#allocation2 + $0x28] sm:$0xff] 0.0
          %588 = vst [vmem:[#allocation2 + $0x30] sm:$0xff] 0.0
          %589 = vst [vmem:[#allocation2 + $0x38] sm:$0xff] 0.0
          %590 = vst [vmem:[#allocation2 + $0x40] sm:$0xff] 0.0
          %591 = vst [vmem:[#allocation2 + $0x48] sm:$0xff] 0.0
          %592 = vst [vmem:[#allocation2 + $0x50] sm:$0xff] 0.0
          %593 = vst [vmem:[#allocation2 + $0x58] sm:$0xff] 0.0
          %594 = vst [vmem:[#allocation2 + $0x60] sm:$0xff] 0.0
          %595 = vst [vmem:[#allocation2 + $0x68] sm:$0xff] 0.0
          %596 = vst [vmem:[#allocation2 + $0x70] sm:$0xff] 0.0
          %597 = vst [vmem:[#allocation2 + $0x78] sm:$0xff] 0.0
          %598 = vst [vmem:[#allocation2 + $0x80] sm:$0xff] 0.0
          %599 = vst [vmem:[#allocation2 + $0x88] sm:$0xff] 0.0
          %600 = vst [vmem:[#allocation2 + $0x90] sm:$0xff] 0.0
          %601 = vst [vmem:[#allocation2 + $0x98] sm:$0xff] 0.0
          %602 = vst [vmem:[#allocation2 + $0xa0] sm:$0xff] 0.0
          %603 = vst [vmem:[#allocation2 + $0xa8] sm:$0xff] 0.0
          %604 = vst [vmem:[#allocation2 + $0xb0] sm:$0xff] 0.0
          %605 = vst [vmem:[#allocation2 + $0xb8] sm:$0xff] 0.0
          %606 = vst [vmem:[#allocation2 + $0xc0] sm:$0xff] 0.0
          %607 = vst [vmem:[#allocation2 + $0xc8] sm:$0xff] 0.0
          %608 = vst [vmem:[#allocation2 + $0xd0] sm:$0xff] 0.0
          %609 = vst [vmem:[#allocation2 + $0xd8] sm:$0xff] 0.0
          %610 = vst [vmem:[#allocation2 + $0xe0] sm:$0xff] 0.0
          %611 = vst [vmem:[#allocation2 + $0xe8] sm:$0xff] 0.0
          %612 = vst [vmem:[#allocation2 + $0xf0] sm:$0xff] 0.0
          %613 = vst [vmem:[#allocation2 + $0xf8] sm:$0xff] 0.0
          %vm614 = vcmask 7168
          %615 = vst.msk [vmem:[#allocation3] sm:$0xff] %vm614, 0.0
          %616 = vst.msk [vmem:[#allocation3 + $0x8] sm:$0xff] %vm614, 0.0
          %617 = vst.msk [vmem:[#allocation3 + $0x10] sm:$0xff] %vm614, 0.0
          %618 = vst.msk [vmem:[#allocation3 + $0x18] sm:$0xff] %vm614, 0.0
          %619 = vst.msk [vmem:[#allocation3 + $0x20] sm:$0xff] %vm614, 0.0
          %620 = vst.msk [vmem:[#allocation3 + $0x28] sm:$0xff] %vm614, 0.0
          %621 = vst.msk [vmem:[#allocation3 + $0x30] sm:$0xff] %vm614, 0.0
          %622 = vst.msk [vmem:[#allocation3 + $0x38] sm:$0xff] %vm614, 0.0
          %623 = vst.msk [vmem:[#allocation3 + $0x40] sm:$0xff] %vm614, 0.0
          %624 = vst.msk [vmem:[#allocation3 + $0x48] sm:$0xff] %vm614, 0.0
          %625 = vst.msk [vmem:[#allocation3 + $0x50] sm:$0xff] %vm614, 0.0
          %626 = vst.msk [vmem:[#allocation3 + $0x58] sm:$0xff] %vm614, 0.0
          %627 = vst.msk [vmem:[#allocation3 + $0x60] sm:$0xff] %vm614, 0.0
          %628 = vst.msk [vmem:[#allocation3 + $0x68] sm:$0xff] %vm614, 0.0
          %629 = vst.msk [vmem:[#allocation3 + $0x70] sm:$0xff] %vm614, 0.0
          %630 = vst.msk [vmem:[#allocation3 + $0x78] sm:$0xff] %vm614, 0.0
        $region82: #{sae_forward.1} parent=73 // pred_fallthru
          _
        %v631 = vld [vmem:[%s554] sm:$0xff]
        %v632 = vld [vmem:[%s554 + $0x8] sm:$0xff]
        %v633 = vld [vmem:[%s554 + $0x10] sm:$0xff]
        %v634 = vld [vmem:[%s554 + $0x18] sm:$0xff]
        %v635 = vld [vmem:[%s554 + $0x20] sm:$0xff]
        %v636 = vld [vmem:[%s554 + $0x28] sm:$0xff]
        %v637 = vld [vmem:[%s554 + $0x30] sm:$0xff]
        %v638 = vld [vmem:[%s554 + $0x38] sm:$0xff]
        %v639 = vld [vmem:[%s554 + $0x40] sm:$0xff]
        %v640 = vld [vmem:[%s554 + $0x48] sm:$0xff]
        %v641 = vld [vmem:[%s554 + $0x50] sm:$0xff]
        %v642 = vld [vmem:[%s554 + $0x58] sm:$0xff]
        %v643 = vld [vmem:[%s554 + $0x60] sm:$0xff]
        %v644 = vld [vmem:[%s554 + $0x68] sm:$0xff]
        %v645 = vld [vmem:[%s554 + $0x70] sm:$0xff]
        %v646 = vld [vmem:[%s554 + $0x78] sm:$0xff]
        %v647 = vld [vmem:[%s554 + $0x80] sm:$0xff]
        %v648 = vld [vmem:[%s554 + $0x88] sm:$0xff]
        %v649 = vld [vmem:[%s554 + $0x90] sm:$0xff]
        %v650 = vld [vmem:[%s554 + $0x98] sm:$0xff]
        %v651 = vld [vmem:[%s554 + $0xa0] sm:$0xff]
        %v652 = vld [vmem:[%s554 + $0xa8] sm:$0xff]
        %v653 = vld [vmem:[%s554 + $0xb0] sm:$0xff]
        %v654 = vld [vmem:[%s554 + $0xb8] sm:$0xff]
        %v655 = vld [vmem:[%s554 + $0xc0] sm:$0xff]
        %v656 = vld [vmem:[%s554 + $0xc8] sm:$0xff]
        %v657 = vld [vmem:[%s554 + $0xd0] sm:$0xff]
        %v658 = vld [vmem:[%s554 + $0xd8] sm:$0xff]
        %v659 = vld [vmem:[%s554 + $0xe0] sm:$0xff]
        %v660 = vld [vmem:[%s554 + $0xe8] sm:$0xff]
        %v661 = vld [vmem:[%s554 + $0xf0] sm:$0xff]
        %v662 = vld [vmem:[%s554 + $0xf8] sm:$0xff]
        %v663 = vpack.c.bf16 %v633, %v631
        %v664 = vpack.c.bf16 %v634, %v632
        %v665 = vpack.c.bf16 %v637, %v635
        %v666 = vpack.c.bf16 %v638, %v636
        %v667 = vpack.c.bf16 %v641, %v639
        %v668 = vpack.c.bf16 %v642, %v640
        %v669 = vpack.c.bf16 %v645, %v643
        %v670 = vpack.c.bf16 %v646, %v644
        %v671 = vpack.c.bf16 %v649, %v647
        %v672 = vpack.c.bf16 %v650, %v648
        %v673 = vpack.c.bf16 %v653, %v651
        %v674 = vpack.c.bf16 %v654, %v652
        %v675 = vpack.c.bf16 %v657, %v655
        %v676 = vpack.c.bf16 %v658, %v656
        %v677 = vpack.c.bf16 %v661, %v659
        %v678 = vpack.c.bf16 %v662, %v660
        %v679 = vld [vmem:[%s491] sm:$0xff]
        %v680 = vld [vmem:[%s491 + $0x8] sm:$0xff]
        %v681 = vld [vmem:[%s491 + $0x10] sm:$0xff]
        %v682 = vld [vmem:[%s491 + $0x18] sm:$0xff]
        %v683 = vld [vmem:[%s491 + $0x20] sm:$0xff]
        %v684 = vld [vmem:[%s491 + $0x28] sm:$0xff]
        %v685 = vld [vmem:[%s491 + $0x30] sm:$0xff]
        %v686 = vld [vmem:[%s491 + $0x38] sm:$0xff]
        %v687 = vld [vmem:[%s491 + $0x40] sm:$0xff]
        %v688 = vld [vmem:[%s491 + $0x48] sm:$0xff]
        %v689 = vld [vmem:[%s491 + $0x50] sm:$0xff]
        %v690 = vld [vmem:[%s491 + $0x58] sm:$0xff]
        %v691 = vld [vmem:[%s491 + $0x60] sm:$0xff]
        %v692 = vld [vmem:[%s491 + $0x68] sm:$0xff]
        %v693 = vld [vmem:[%s491 + $0x70] sm:$0xff]
        %v694 = vld [vmem:[%s491 + $0x78] sm:$0xff]
        %v695 = vld [vmem:[%s491 + $0x80] sm:$0xff]
        %v696 = vld [vmem:[%s491 + $0x88] sm:$0xff]
        %v697 = vld [vmem:[%s491 + $0x90] sm:$0xff]
        %v698 = vld [vmem:[%s491 + $0x98] sm:$0xff]
        %v699 = vld [vmem:[%s491 + $0xa0] sm:$0xff]
        %v700 = vld [vmem:[%s491 + $0xa8] sm:$0xff]
        %v701 = vld [vmem:[%s491 + $0xb0] sm:$0xff]
        %v702 = vld [vmem:[%s491 + $0xb8] sm:$0xff]
        %v703 = vld [vmem:[%s491 + $0xc0] sm:$0xff]
        %v704 = vld [vmem:[%s491 + $0xc8] sm:$0xff]
        %v705 = vld [vmem:[%s491 + $0xd0] sm:$0xff]
        %v706 = vld [vmem:[%s491 + $0xd8] sm:$0xff]
        %v707 = vld [vmem:[%s491 + $0xe0] sm:$0xff]
        %v708 = vld [vmem:[%s491 + $0xe8] sm:$0xff]
        %v709 = vld [vmem:[%s491 + $0xf0] sm:$0xff]
        %v710 = vld [vmem:[%s491 + $0xf8] sm:$0xff]
        %v711 = vld [vmem:[%s560] sm:$0x3]
        %v713 = vlaneseq
        %v714 = vshrl.u32 %v713, 7
        %v715 = vsub.s32 0, %v714
        %v716 = vrot.slane %v711, %v715
        %v717 = vlaneseq
        %v718 = vshrl.u32 %v717, 7
        %v719 = vsub.s32 1, %v718
        %v720 = vrot.slane %v711, %v719
        %v755 = vunpack.c.l.b16 %v679
        %v756 = vunpack.c.h.b16 %v679
        %v757 = vunpack.c.l.b16 %v680
        %v758 = vunpack.c.h.b16 %v680
        %v759 = vunpack.c.l.b16 %v681
        %v760 = vunpack.c.h.b16 %v681
        %v761 = vunpack.c.l.b16 %v682
        %v762 = vunpack.c.h.b16 %v682
        %v763 = vunpack.c.l.b16 %v683
        %v764 = vunpack.c.h.b16 %v683
        %v765 = vunpack.c.l.b16 %v684
        %v766 = vunpack.c.h.b16 %v684
        %v767 = vunpack.c.l.b16 %v685
        %v768 = vunpack.c.h.b16 %v685
        %v769 = vunpack.c.l.b16 %v686
        %v770 = vunpack.c.h.b16 %v686
        %v771 = vunpack.c.l.b16 %v687
        %v772 = vunpack.c.h.b16 %v687
        %v773 = vunpack.c.l.b16 %v688
        %v774 = vunpack.c.h.b16 %v688
        %v775 = vunpack.c.l.b16 %v689
        %v776 = vunpack.c.h.b16 %v689
        %v777 = vunpack.c.l.b16 %v690
        %v778 = vunpack.c.h.b16 %v690
        %v779 = vunpack.c.l.b16 %v691
        %v780 = vunpack.c.h.b16 %v691
        %v781 = vunpack.c.l.b16 %v692
        %v782 = vunpack.c.h.b16 %v692
        %v783 = vunpack.c.l.b16 %v693
        %v784 = vunpack.c.h.b16 %v693
        %v785 = vunpack.c.l.b16 %v694
        %v786 = vunpack.c.h.b16 %v694
        %v787 = vunpack.c.l.b16 %v695
        %v788 = vunpack.c.h.b16 %v695
        %v789 = vunpack.c.l.b16 %v696
        %v790 = vunpack.c.h.b16 %v696
        %v791 = vunpack.c.l.b16 %v697
        %v792 = vunpack.c.h.b16 %v697
        %v793 = vunpack.c.l.b16 %v698
        %v794 = vunpack.c.h.b16 %v698
        %v795 = vunpack.c.l.b16 %v699
        %v796 = vunpack.c.h.b16 %v699
        %v797 = vunpack.c.l.b16 %v700
        %v798 = vunpack.c.h.b16 %v700
        %v799 = vunpack.c.l.b16 %v701
        %v800 = vunpack.c.h.b16 %v701
        %v801 = vunpack.c.l.b16 %v702
        %v802 = vunpack.c.h.b16 %v702
        %v803 = vunpack.c.l.b16 %v703
        %v804 = vunpack.c.h.b16 %v703
        %v805 = vunpack.c.l.b16 %v704
        %v806 = vunpack.c.h.b16 %v704
        %v807 = vunpack.c.l.b16 %v705
        %v808 = vunpack.c.h.b16 %v705
        %v809 = vunpack.c.l.b16 %v706
        %v810 = vunpack.c.h.b16 %v706
        %v811 = vunpack.c.l.b16 %v707
        %v812 = vunpack.c.h.b16 %v707
        %v813 = vunpack.c.l.b16 %v708
        %v814 = vunpack.c.h.b16 %v708
        %v815 = vunpack.c.l.b16 %v709
        %v816 = vunpack.c.h.b16 %v709
        %v817 = vunpack.c.l.b16 %v710
        %v818 = vunpack.c.h.b16 %v710
        %v819 = vpack.c.b16 %v757, %v755
        %v820 = vpack.c.b16 %v758, %v756
        %v821 = vpack.c.b16 %v761, %v759
        %v822 = vpack.c.b16 %v762, %v760
        %v823 = vpack.c.b16 %v765, %v763
        %v824 = vpack.c.b16 %v766, %v764
        %v825 = vpack.c.b16 %v769, %v767
        %v826 = vpack.c.b16 %v770, %v768
        %v827 = vpack.c.b16 %v773, %v771
        %v828 = vpack.c.b16 %v774, %v772
        %v829 = vpack.c.b16 %v777, %v775
        %v830 = vpack.c.b16 %v778, %v776
        %v831 = vpack.c.b16 %v781, %v779
        %v832 = vpack.c.b16 %v782, %v780
        %v833 = vpack.c.b16 %v785, %v783
        %v834 = vpack.c.b16 %v786, %v784
        %v835 = vpack.c.b16 %v789, %v787
        %v836 = vpack.c.b16 %v790, %v788
        %v837 = vpack.c.b16 %v793, %v791
        %v838 = vpack.c.b16 %v794, %v792
        %v839 = vpack.c.b16 %v797, %v795
        %v840 = vpack.c.b16 %v798, %v796
        %v841 = vpack.c.b16 %v801, %v799
        %v842 = vpack.c.b16 %v802, %v800
        %v843 = vpack.c.b16 %v805, %v803
        %v844 = vpack.c.b16 %v806, %v804
        %v845 = vpack.c.b16 %v809, %v807
        %v846 = vpack.c.b16 %v810, %v808
        %v847 = vpack.c.b16 %v813, %v811
        %v848 = vpack.c.b16 %v814, %v812
        %v849 = vpack.c.b16 %v817, %v815
        %v850 = vpack.c.b16 %v818, %v816
        %883 = vmatprep.subr.bf16.mxu0 %v834
        %884 = vmatpush1.bf16.msra.mxu0 %v833
        %885 = vmatprep.subr.bf16.mxu0 %v832
        %886 = vmatpush1.bf16.msra.mxu0 %v831
        %887 = vmatprep.subr.bf16.mxu0 %v830
        %888 = vmatpush1.bf16.msra.mxu0 %v829
        %889 = vmatprep.subr.bf16.mxu0 %v828
        %890 = vmatpush1.bf16.msra.mxu0 %v827
        %891 = vmatprep.subr.bf16.mxu0 %v826
        %892 = vmatpush1.bf16.msra.mxu0 %v825
        %893 = vmatprep.subr.bf16.mxu0 %v824
        %894 = vmatpush1.bf16.msra.mxu0 %v823
        %895 = vmatprep.subr.bf16.mxu0 %v822
        %896 = vmatpush1.bf16.msra.mxu0 %v821
        %897 = vmatprep.subr.bf16.mxu0 %v820
        %898 = vmatpush1.bf16.msra.mxu0 %v819
        %899 = vmatprep.subr.bf16.mxu0 %v850
        %900 = vmatpush2.bf16.msra.mxu0 %v849
        %901 = vmatprep.subr.bf16.mxu0 %v848
        %902 = vmatpush2.bf16.msra.mxu0 %v847
        %903 = vmatprep.subr.bf16.mxu0 %v846
        %904 = vmatpush2.bf16.msra.mxu0 %v845
        %905 = vmatprep.subr.bf16.mxu0 %v844
        %906 = vmatpush2.bf16.msra.mxu0 %v843
        %907 = vmatprep.subr.bf16.mxu0 %v842
        %908 = vmatpush2.bf16.msra.mxu0 %v841
        %909 = vmatprep.subr.bf16.mxu0 %v840
        %910 = vmatpush2.bf16.msra.mxu0 %v839
        %911 = vmatprep.subr.bf16.mxu0 %v838
        %912 = vmatpush2.bf16.msra.mxu0 %v837
        %913 = vmatprep.subr.bf16.mxu0 %v836
        %914 = vmatpush2.bf16.msra.mxu0 %v835
        %915 = vmatprep.mubr.bf16.mxu0 %v664
        %916 = vmatmul.mubr.bf16.gmra.mxu0 %v663
        %v917 = vpop.f32.mrf.mxu0
        %v918 = vadd.f32 %v716, %v917
        %v919 = vpop.f32.mrf.mxu0
        %v920 = vadd.f32 %v720, %v919
        %v921 = vpop.f32.mrf.mxu0
        %v922 = vadd.f32 %v716, %v921
        %v923 = vpop.f32.mrf.mxu0
        %v924 = vadd.f32 %v720, %v923
        %925 = vmatprep.mubr.bf16.mxu0 %v666
        %926 = vmatmul.mubr.bf16.gmra.mxu0 %v665
        %v927 = vpop.f32.mrf.mxu0
        %v928 = vadd.f32 %v716, %v927
        %v929 = vpop.f32.mrf.mxu0
        %v930 = vadd.f32 %v720, %v929
        %v931 = vpop.f32.mrf.mxu0
        %v932 = vadd.f32 %v716, %v931
        %v933 = vpop.f32.mrf.mxu0
        %v934 = vadd.f32 %v720, %v933
        %935 = vmatprep.mubr.bf16.mxu0 %v668
        %936 = vmatmul.mubr.bf16.gmra.mxu0 %v667
        %v937 = vpop.f32.mrf.mxu0
        %v938 = vadd.f32 %v716, %v937
        %v939 = vpop.f32.mrf.mxu0
        %v940 = vadd.f32 %v720, %v939
        %v941 = vpop.f32.mrf.mxu0
        %v942 = vadd.f32 %v716, %v941
        %v943 = vpop.f32.mrf.mxu0
        %v944 = vadd.f32 %v720, %v943
        %945 = vmatprep.mubr.bf16.mxu0 %v670
        %946 = vmatmul.mubr.bf16.gmra.mxu0 %v669
        %v947 = vpop.f32.mrf.mxu0
        %v948 = vadd.f32 %v716, %v947
        %v949 = vpop.f32.mrf.mxu0
        %v950 = vadd.f32 %v720, %v949
        %v951 = vpop.f32.mrf.mxu0
        %v952 = vadd.f32 %v716, %v951
        %v953 = vpop.f32.mrf.mxu0
        %v954 = vadd.f32 %v720, %v953
        %955 = vmatprep.mubr.bf16.mxu0 %v672
        %956 = vmatmul.mubr.bf16.gmra.mxu0 %v671
        %v957 = vpop.f32.mrf.mxu0
        %v958 = vadd.f32 %v716, %v957
        %v959 = vpop.f32.mrf.mxu0
        %v960 = vadd.f32 %v720, %v959
        %v961 = vpop.f32.mrf.mxu0
        %v962 = vadd.f32 %v716, %v961
        %v963 = vpop.f32.mrf.mxu0
        %v964 = vadd.f32 %v720, %v963
        %965 = vmatprep.mubr.bf16.mxu0 %v674
        %966 = vmatmul.mubr.bf16.gmra.mxu0 %v673
        %v967 = vpop.f32.mrf.mxu0
        %v968 = vadd.f32 %v716, %v967
        %v969 = vpop.f32.mrf.mxu0
        %v970 = vadd.f32 %v720, %v969
        %v971 = vpop.f32.mrf.mxu0
        %v972 = vadd.f32 %v716, %v971
        %v973 = vpop.f32.mrf.mxu0
        %v974 = vadd.f32 %v720, %v973
        %975 = vmatprep.mubr.bf16.mxu0 %v676
        %976 = vmatmul.mubr.bf16.gmra.mxu0 %v675
        %v977 = vpop.f32.mrf.mxu0
        %v978 = vadd.f32 %v716, %v977
        %v979 = vpop.f32.mrf.mxu0
        %v980 = vadd.f32 %v720, %v979
        %v981 = vpop.f32.mrf.mxu0
        %v982 = vadd.f32 %v716, %v981
        %v983 = vpop.f32.mrf.mxu0
        %v984 = vadd.f32 %v720, %v983
        %985 = vmatprep.mubr.bf16.mxu0 %v678
        %986 = vmatmul.mubr.bf16.gmra.mxu0 %v677
        %v987 = vpop.f32.mrf.mxu0
        %v988 = vadd.f32 %v716, %v987
        %v989 = vpop.f32.mrf.mxu0
        %v990 = vadd.f32 %v720, %v989
        %v991 = vpop.f32.mrf.mxu0
        %v992 = vadd.f32 %v716, %v991
        %v993 = vpop.f32.mrf.mxu0
        %v994 = vadd.f32 %v720, %v993
        %995 = vdwg.mxu0
        %v996 = vmax.f32 %v918, 0.0
        %v997 = vmax.f32 %v920, 0.0
        %v998 = vmax.f32 %v922, 0.0
        %v999 = vmax.f32 %v924, 0.0
        %v1000 = vmax.f32 %v928, 0.0
        %v1001 = vmax.f32 %v930, 0.0
        %v1002 = vmax.f32 %v932, 0.0
        %v1003 = vmax.f32 %v934, 0.0
        %v1004 = vmax.f32 %v938, 0.0
        %v1005 = vmax.f32 %v940, 0.0
        %v1006 = vmax.f32 %v942, 0.0
        %v1007 = vmax.f32 %v944, 0.0
        %v1008 = vmax.f32 %v948, 0.0
        %v1009 = vmax.f32 %v950, 0.0
        %v1010 = vmax.f32 %v952, 0.0
        %v1011 = vmax.f32 %v954, 0.0
        %v1012 = vmax.f32 %v958, 0.0
        %v1013 = vmax.f32 %v960, 0.0
        %v1014 = vmax.f32 %v962, 0.0
        %v1015 = vmax.f32 %v964, 0.0
        %v1016 = vmax.f32 %v968, 0.0
        %v1017 = vmax.f32 %v970, 0.0
        %v1018 = vmax.f32 %v972, 0.0
        %v1019 = vmax.f32 %v974, 0.0
        %v1020 = vmax.f32 %v978, 0.0
        %v1021 = vmax.f32 %v980, 0.0
        %v1022 = vmax.f32 %v982, 0.0
        %v1023 = vmax.f32 %v984, 0.0
        %v1024 = vmax.f32 %v988, 0.0
        %v1025 = vmax.f32 %v990, 0.0
        %v1026 = vmax.f32 %v992, 0.0
        %v1027 = vmax.f32 %v994, 0.0
        %1028 = vst [vmem:[%s538] sm:$0xff] %v996
        %1029 = vst [vmem:[%s538 + $0x8] sm:$0xff] %v997
        %1030 = vst [vmem:[%s538 + $0x10] sm:$0xff] %v998
        %1031 = vst [vmem:[%s538 + $0x18] sm:$0xff] %v999
        %1032 = vst [vmem:[%s538 + $0x20] sm:$0xff] %v1000
        %1033 = vst [vmem:[%s538 + $0x28] sm:$0xff] %v1001
        %1034 = vst [vmem:[%s538 + $0x30] sm:$0xff] %v1002
        %1035 = vst [vmem:[%s538 + $0x38] sm:$0xff] %v1003
        %1036 = vst [vmem:[%s538 + $0x40] sm:$0xff] %v1004
        %1037 = vst [vmem:[%s538 + $0x48] sm:$0xff] %v1005
        %1038 = vst [vmem:[%s538 + $0x50] sm:$0xff] %v1006
        %1039 = vst [vmem:[%s538 + $0x58] sm:$0xff] %v1007
        %1040 = vst [vmem:[%s538 + $0x60] sm:$0xff] %v1008
        %1041 = vst [vmem:[%s538 + $0x68] sm:$0xff] %v1009
        %1042 = vst [vmem:[%s538 + $0x70] sm:$0xff] %v1010
        %1043 = vst [vmem:[%s538 + $0x78] sm:$0xff] %v1011
        %1044 = vst [vmem:[%s538 + $0x80] sm:$0xff] %v1012
        %1045 = vst [vmem:[%s538 + $0x88] sm:$0xff] %v1013
        %1046 = vst [vmem:[%s538 + $0x90] sm:$0xff] %v1014
        %1047 = vst [vmem:[%s538 + $0x98] sm:$0xff] %v1015
        %1048 = vst [vmem:[%s538 + $0xa0] sm:$0xff] %v1016
        %1049 = vst [vmem:[%s538 + $0xa8] sm:$0xff] %v1017
        %1050 = vst [vmem:[%s538 + $0xb0] sm:$0xff] %v1018
        %1051 = vst [vmem:[%s538 + $0xb8] sm:$0xff] %v1019
        %1052 = vst [vmem:[%s538 + $0xc0] sm:$0xff] %v1020
        %1053 = vst [vmem:[%s538 + $0xc8] sm:$0xff] %v1021
        %1054 = vst [vmem:[%s538 + $0xd0] sm:$0xff] %v1022
        %1055 = vst [vmem:[%s538 + $0xd8] sm:$0xff] %v1023
        %1056 = vst [vmem:[%s538 + $0xe0] sm:$0xff] %v1024
        %1057 = vst [vmem:[%s538 + $0xe8] sm:$0xff] %v1025
        %1058 = vst [vmem:[%s538 + $0xf0] sm:$0xff] %v1026
        %1059 = vst [vmem:[%s538 + $0xf8] sm:$0xff] %v1027
        %v1060 = vld [vmem:[#allocation3] sm:$0xff]
        %v1061 = vld [vmem:[#allocation3 + $0x8] sm:$0xff]
        %v1062 = vld [vmem:[#allocation3 + $0x10] sm:$0xff]
        %v1063 = vld [vmem:[#allocation3 + $0x18] sm:$0xff]
        %v1064 = vld [vmem:[#allocation3 + $0x20] sm:$0xff]
        %v1065 = vld [vmem:[#allocation3 + $0x28] sm:$0xff]
        %v1066 = vld [vmem:[#allocation3 + $0x30] sm:$0xff]
        %v1067 = vld [vmem:[#allocation3 + $0x38] sm:$0xff]
        %v1068 = vld [vmem:[#allocation3 + $0x40] sm:$0xff]
        %v1069 = vld [vmem:[#allocation3 + $0x48] sm:$0xff]
        %v1070 = vld [vmem:[#allocation3 + $0x50] sm:$0xff]
        %v1071 = vld [vmem:[#allocation3 + $0x58] sm:$0xff]
        %v1072 = vld [vmem:[#allocation3 + $0x60] sm:$0xff]
        %v1073 = vld [vmem:[#allocation3 + $0x68] sm:$0xff]
        %v1074 = vld [vmem:[#allocation3 + $0x70] sm:$0xff]
        %v1075 = vld [vmem:[#allocation3 + $0x78] sm:$0xff]
        %v1076 = vadd.f32 %v996, %v997
        %1077 = vadd.xlane.f32.xlu0 %v1076
        %v1078 = vpop.xlane.xlu0 %1077
        %v1079 = vadd.f32 %v998, %v999
        %1080 = vadd.xlane.f32.xlu0 %v1079
        %v1081 = vpop.xlane.xlu0 %1080
        %v1082 = vadd.f32 %v1000, %v1001
        %1083 = vadd.xlane.f32.xlu0 %v1082
        %v1084 = vpop.xlane.xlu0 %1083
        %v1085 = vadd.f32 %v1002, %v1003
        %1086 = vadd.xlane.f32.xlu0 %v1085
        %v1087 = vpop.xlane.xlu0 %1086
        %v1088 = vadd.f32 %v1004, %v1005
        %1089 = vadd.xlane.f32.xlu0 %v1088
        %v1090 = vpop.xlane.xlu0 %1089
        %v1091 = vadd.f32 %v1006, %v1007
        %1092 = vadd.xlane.f32.xlu0 %v1091
        %v1093 = vpop.xlane.xlu0 %1092
        %v1094 = vadd.f32 %v1008, %v1009
        %1095 = vadd.xlane.f32.xlu0 %v1094
        %v1096 = vpop.xlane.xlu0 %1095
        %v1097 = vadd.f32 %v1010, %v1011
        %1098 = vadd.xlane.f32.xlu0 %v1097
        %v1099 = vpop.xlane.xlu0 %1098
        %v1100 = vadd.f32 %v1012, %v1013
        %1101 = vadd.xlane.f32.xlu0 %v1100
        %v1102 = vpop.xlane.xlu0 %1101
        %v1103 = vadd.f32 %v1014, %v1015
        %1104 = vadd.xlane.f32.xlu0 %v1103
        %v1105 = vpop.xlane.xlu0 %1104
        %v1106 = vadd.f32 %v1016, %v1017
        %1107 = vadd.xlane.f32.xlu0 %v1106
        %v1108 = vpop.xlane.xlu0 %1107
        %v1109 = vadd.f32 %v1018, %v1019
        %1110 = vadd.xlane.f32.xlu0 %v1109
        %v1111 = vpop.xlane.xlu0 %1110
        %v1112 = vadd.f32 %v1020, %v1021
        %1113 = vadd.xlane.f32.xlu0 %v1112
        %v1114 = vpop.xlane.xlu0 %1113
        %v1115 = vadd.f32 %v1022, %v1023
        %1116 = vadd.xlane.f32.xlu0 %v1115
        %v1117 = vpop.xlane.xlu0 %1116
        %v1118 = vadd.f32 %v1024, %v1025
        %1119 = vadd.xlane.f32.xlu0 %v1118
        %v1120 = vpop.xlane.xlu0 %1119
        %v1121 = vadd.f32 %v1026, %v1027
        %1122 = vadd.xlane.f32.xlu0 %v1121
        %v1123 = vpop.xlane.xlu0 %1122
        %v1124 = vadd.f32 %v1060, %v1078
        %v1125 = vadd.f32 %v1061, %v1081
        %v1126 = vadd.f32 %v1062, %v1084
        %v1127 = vadd.f32 %v1063, %v1087
        %v1128 = vadd.f32 %v1064, %v1090
        %v1129 = vadd.f32 %v1065, %v1093
        %v1130 = vadd.f32 %v1066, %v1096
        %v1131 = vadd.f32 %v1067, %v1099
        %v1132 = vadd.f32 %v1068, %v1102
        %v1133 = vadd.f32 %v1069, %v1105
        %v1134 = vadd.f32 %v1070, %v1108
        %v1135 = vadd.f32 %v1071, %v1111
        %v1136 = vadd.f32 %v1072, %v1114
        %v1137 = vadd.f32 %v1073, %v1117
        %v1138 = vadd.f32 %v1074, %v1120
        %v1139 = vadd.f32 %v1075, %v1123
        %vm1140 = vcmask 7168
        %1141 = vst.msk [vmem:[#allocation3] sm:$0xff] %vm1140, %v1124
        %1142 = vst.msk [vmem:[#allocation3 + $0x8] sm:$0xff] %vm1140, %v1125
        %1143 = vst.msk [vmem:[#allocation3 + $0x10] sm:$0xff] %vm1140, %v1126
        %1144 = vst.msk [vmem:[#allocation3 + $0x18] sm:$0xff] %vm1140, %v1127
        %1145 = vst.msk [vmem:[#allocation3 + $0x20] sm:$0xff] %vm1140, %v1128
        %1146 = vst.msk [vmem:[#allocation3 + $0x28] sm:$0xff] %vm1140, %v1129
        %1147 = vst.msk [vmem:[#allocation3 + $0x30] sm:$0xff] %vm1140, %v1130
        %1148 = vst.msk [vmem:[#allocation3 + $0x38] sm:$0xff] %vm1140, %v1131
        %1149 = vst.msk [vmem:[#allocation3 + $0x40] sm:$0xff] %vm1140, %v1132
        %1150 = vst.msk [vmem:[#allocation3 + $0x48] sm:$0xff] %vm1140, %v1133
        %1151 = vst.msk [vmem:[#allocation3 + $0x50] sm:$0xff] %vm1140, %v1134
        %1152 = vst.msk [vmem:[#allocation3 + $0x58] sm:$0xff] %vm1140, %v1135
        %1153 = vst.msk [vmem:[#allocation3 + $0x60] sm:$0xff] %vm1140, %v1136
        %1154 = vst.msk [vmem:[#allocation3 + $0x68] sm:$0xff] %vm1140, %v1137
        %1155 = vst.msk [vmem:[#allocation3 + $0x70] sm:$0xff] %vm1140, %v1138
        %1156 = vst.msk [vmem:[#allocation3 + $0x78] sm:$0xff] %vm1140, %v1139
        %v1157 = vld [vmem:[#allocation2] sm:$0xff]
        %v1158 = vld [vmem:[#allocation2 + $0x8] sm:$0xff]
        %v1159 = vld [vmem:[#allocation2 + $0x10] sm:$0xff]
        %v1160 = vld [vmem:[#allocation2 + $0x18] sm:$0xff]
        %v1161 = vld [vmem:[#allocation2 + $0x20] sm:$0xff]
        %v1162 = vld [vmem:[#allocation2 + $0x28] sm:$0xff]
        %v1163 = vld [vmem:[#allocation2 + $0x30] sm:$0xff]
        %v1164 = vld [vmem:[#allocation2 + $0x38] sm:$0xff]
        %v1165 = vld [vmem:[#allocation2 + $0x40] sm:$0xff]
        %v1166 = vld [vmem:[#allocation2 + $0x48] sm:$0xff]
        %v1167 = vld [vmem:[#allocation2 + $0x50] sm:$0xff]
        %v1168 = vld [vmem:[#allocation2 + $0x58] sm:$0xff]
        %v1169 = vld [vmem:[#allocation2 + $0x60] sm:$0xff]
        %v1170 = vld [vmem:[#allocation2 + $0x68] sm:$0xff]
        %v1171 = vld [vmem:[#allocation2 + $0x70] sm:$0xff]
        %v1172 = vld [vmem:[#allocation2 + $0x78] sm:$0xff]
        %v1173 = vld [vmem:[#allocation2 + $0x80] sm:$0xff]
        %v1174 = vld [vmem:[#allocation2 + $0x88] sm:$0xff]
        %v1175 = vld [vmem:[#allocation2 + $0x90] sm:$0xff]
        %v1176 = vld [vmem:[#allocation2 + $0x98] sm:$0xff]
        %v1177 = vld [vmem:[#allocation2 + $0xa0] sm:$0xff]
        %v1178 = vld [vmem:[#allocation2 + $0xa8] sm:$0xff]
        %v1179 = vld [vmem:[#allocation2 + $0xb0] sm:$0xff]
        %v1180 = vld [vmem:[#allocation2 + $0xb8] sm:$0xff]
        %v1181 = vld [vmem:[#allocation2 + $0xc0] sm:$0xff]
        %v1182 = vld [vmem:[#allocation2 + $0xc8] sm:$0xff]
        %v1183 = vld [vmem:[#allocation2 + $0xd0] sm:$0xff]
        %v1184 = vld [vmem:[#allocation2 + $0xd8] sm:$0xff]
        %v1185 = vld [vmem:[#allocation2 + $0xe0] sm:$0xff]
        %v1186 = vld [vmem:[#allocation2 + $0xe8] sm:$0xff]
        %v1187 = vld [vmem:[#allocation2 + $0xf0] sm:$0xff]
        %v1188 = vld [vmem:[#allocation2 + $0xf8] sm:$0xff]
        %v1189 = vpack.c.bf16 %v998, %v996
        %v1190 = vpack.c.bf16 %v999, %v997
        %v1191 = vpack.c.bf16 %v1002, %v1000
        %v1192 = vpack.c.bf16 %v1003, %v1001
        %v1193 = vpack.c.bf16 %v1006, %v1004
        %v1194 = vpack.c.bf16 %v1007, %v1005
        %v1195 = vpack.c.bf16 %v1010, %v1008
        %v1196 = vpack.c.bf16 %v1011, %v1009
        %v1197 = vpack.c.bf16 %v1014, %v1012
        %v1198 = vpack.c.bf16 %v1015, %v1013
        %v1199 = vpack.c.bf16 %v1018, %v1016
        %v1200 = vpack.c.bf16 %v1019, %v1017
        %v1201 = vpack.c.bf16 %v1022, %v1020
        %v1202 = vpack.c.bf16 %v1023, %v1021
        %v1203 = vpack.c.bf16 %v1026, %v1024
        %v1204 = vpack.c.bf16 %v1027, %v1025
        %v1205 = vld [vmem:[%s567] sm:$0xff]
        %v1206 = vld [vmem:[%s567 + $0x8] sm:$0xff]
        %v1207 = vld [vmem:[%s567 + $0x10] sm:$0xff]
        %v1208 = vld [vmem:[%s567 + $0x18] sm:$0xff]
        %v1209 = vld [vmem:[%s567 + $0x20] sm:$0xff]
        %v1210 = vld [vmem:[%s567 + $0x28] sm:$0xff]
        %v1211 = vld [vmem:[%s567 + $0x30] sm:$0xff]
        %v1212 = vld [vmem:[%s567 + $0x38] sm:$0xff]
        %v1213 = vld [vmem:[%s567 + $0x40] sm:$0xff]
        %v1214 = vld [vmem:[%s567 + $0x48] sm:$0xff]
        %v1215 = vld [vmem:[%s567 + $0x50] sm:$0xff]
        %v1216 = vld [vmem:[%s567 + $0x58] sm:$0xff]
        %v1217 = vld [vmem:[%s567 + $0x60] sm:$0xff]
        %v1218 = vld [vmem:[%s567 + $0x68] sm:$0xff]
        %v1219 = vld [vmem:[%s567 + $0x70] sm:$0xff]
        %v1220 = vld [vmem:[%s567 + $0x78] sm:$0xff]
        %v1221 = vld [vmem:[%s567 + $0x80] sm:$0xff]
        %v1222 = vld [vmem:[%s567 + $0x88] sm:$0xff]
        %v1223 = vld [vmem:[%s567 + $0x90] sm:$0xff]
        %v1224 = vld [vmem:[%s567 + $0x98] sm:$0xff]
        %v1225 = vld [vmem:[%s567 + $0xa0] sm:$0xff]
        %v1226 = vld [vmem:[%s567 + $0xa8] sm:$0xff]
        %v1227 = vld [vmem:[%s567 + $0xb0] sm:$0xff]
        %v1228 = vld [vmem:[%s567 + $0xb8] sm:$0xff]
        %v1229 = vld [vmem:[%s567 + $0xc0] sm:$0xff]
        %v1230 = vld [vmem:[%s567 + $0xc8] sm:$0xff]
        %v1231 = vld [vmem:[%s567 + $0xd0] sm:$0xff]
        %v1232 = vld [vmem:[%s567 + $0xd8] sm:$0xff]
        %v1233 = vld [vmem:[%s567 + $0xe0] sm:$0xff]
        %v1234 = vld [vmem:[%s567 + $0xe8] sm:$0xff]
        %v1235 = vld [vmem:[%s567 + $0xf0] sm:$0xff]
        %v1236 = vld [vmem:[%s567 + $0xf8] sm:$0xff]
        %v1269 = vunpack.c.l.b16 %v1205
        %v1270 = vunpack.c.h.b16 %v1205
        %v1271 = vunpack.c.l.b16 %v1206
        %v1272 = vunpack.c.h.b16 %v1206
        %v1273 = vunpack.c.l.b16 %v1207
        %v1274 = vunpack.c.h.b16 %v1207
        %v1275 = vunpack.c.l.b16 %v1208
        %v1276 = vunpack.c.h.b16 %v1208
        %v1277 = vunpack.c.l.b16 %v1209
        %v1278 = vunpack.c.h.b16 %v1209
        %v1279 = vunpack.c.l.b16 %v1210
        %v1280 = vunpack.c.h.b16 %v1210
        %v1281 = vunpack.c.l.b16 %v1211
        %v1282 = vunpack.c.h.b16 %v1211
        %v1283 = vunpack.c.l.b16 %v1212
        %v1284 = vunpack.c.h.b16 %v1212
        %v1285 = vunpack.c.l.b16 %v1213
        %v1286 = vunpack.c.h.b16 %v1213
        %v1287 = vunpack.c.l.b16 %v1214
        %v1288 = vunpack.c.h.b16 %v1214
        %v1289 = vunpack.c.l.b16 %v1215
        %v1290 = vunpack.c.h.b16 %v1215
        %v1291 = vunpack.c.l.b16 %v1216
        %v1292 = vunpack.c.h.b16 %v1216
        %v1293 = vunpack.c.l.b16 %v1217
        %v1294 = vunpack.c.h.b16 %v1217
        %v1295 = vunpack.c.l.b16 %v1218
        %v1296 = vunpack.c.h.b16 %v1218
        %v1297 = vunpack.c.l.b16 %v1219
        %v1298 = vunpack.c.h.b16 %v1219
        %v1299 = vunpack.c.l.b16 %v1220
        %v1300 = vunpack.c.h.b16 %v1220
        %v1301 = vunpack.c.l.b16 %v1221
        %v1302 = vunpack.c.h.b16 %v1221
        %v1303 = vunpack.c.l.b16 %v1222
        %v1304 = vunpack.c.h.b16 %v1222
        %v1305 = vunpack.c.l.b16 %v1223
        %v1306 = vunpack.c.h.b16 %v1223
        %v1307 = vunpack.c.l.b16 %v1224
        %v1308 = vunpack.c.h.b16 %v1224
        %v1309 = vunpack.c.l.b16 %v1225
        %v1310 = vunpack.c.h.b16 %v1225
        %v1311 = vunpack.c.l.b16 %v1226
        %v1312 = vunpack.c.h.b16 %v1226
        %v1313 = vunpack.c.l.b16 %v1227
        %v1314 = vunpack.c.h.b16 %v1227
        %v1315 = vunpack.c.l.b16 %v1228
        %v1316 = vunpack.c.h.b16 %v1228
        %v1317 = vunpack.c.l.b16 %v1229
        %v1318 = vunpack.c.h.b16 %v1229
        %v1319 = vunpack.c.l.b16 %v1230
        %v1320 = vunpack.c.h.b16 %v1230
        %v1321 = vunpack.c.l.b16 %v1231
        %v1322 = vunpack.c.h.b16 %v1231
        %v1323 = vunpack.c.l.b16 %v1232
        %v1324 = vunpack.c.h.b16 %v1232
        %v1325 = vunpack.c.l.b16 %v1233
        %v1326 = vunpack.c.h.b16 %v1233
        %v1327 = vunpack.c.l.b16 %v1234
        %v1328 = vunpack.c.h.b16 %v1234
        %v1329 = vunpack.c.l.b16 %v1235
        %v1330 = vunpack.c.h.b16 %v1235
        %v1331 = vunpack.c.l.b16 %v1236
        %v1332 = vunpack.c.h.b16 %v1236
        %v1333 = vpack.c.b16 %v1271, %v1269
        %v1334 = vpack.c.b16 %v1272, %v1270
        %v1335 = vpack.c.b16 %v1275, %v1273
        %v1336 = vpack.c.b16 %v1276, %v1274
        %v1337 = vpack.c.b16 %v1279, %v1277
        %v1338 = vpack.c.b16 %v1280, %v1278
        %v1339 = vpack.c.b16 %v1283, %v1281
        %v1340 = vpack.c.b16 %v1284, %v1282
        %v1341 = vpack.c.b16 %v1287, %v1285
        %v1342 = vpack.c.b16 %v1288, %v1286
        %v1343 = vpack.c.b16 %v1291, %v1289
        %v1344 = vpack.c.b16 %v1292, %v1290
        %v1345 = vpack.c.b16 %v1295, %v1293
        %v1346 = vpack.c.b16 %v1296, %v1294
        %v1347 = vpack.c.b16 %v1299, %v1297
        %v1348 = vpack.c.b16 %v1300, %v1298
        %v1349 = vpack.c.b16 %v1303, %v1301
        %v1350 = vpack.c.b16 %v1304, %v1302
        %v1351 = vpack.c.b16 %v1307, %v1305
        %v1352 = vpack.c.b16 %v1308, %v1306
        %v1353 = vpack.c.b16 %v1311, %v1309
        %v1354 = vpack.c.b16 %v1312, %v1310
        %v1355 = vpack.c.b16 %v1315, %v1313
        %v1356 = vpack.c.b16 %v1316, %v1314
        %v1357 = vpack.c.b16 %v1319, %v1317
        %v1358 = vpack.c.b16 %v1320, %v1318
        %v1359 = vpack.c.b16 %v1323, %v1321
        %v1360 = vpack.c.b16 %v1324, %v1322
        %v1361 = vpack.c.b16 %v1327, %v1325
        %v1362 = vpack.c.b16 %v1328, %v1326
        %v1363 = vpack.c.b16 %v1331, %v1329
        %v1364 = vpack.c.b16 %v1332, %v1330
        %1397 = vmatprep.subr.bf16.mxu0 %v1348
        %1398 = vmatpush1.bf16.msra.mxu0 %v1347
        %1399 = vmatprep.subr.bf16.mxu0 %v1346
        %1400 = vmatpush1.bf16.msra.mxu0 %v1345
        %1401 = vmatprep.subr.bf16.mxu0 %v1344
        %1402 = vmatpush1.bf16.msra.mxu0 %v1343
        %1403 = vmatprep.subr.bf16.mxu0 %v1342
        %1404 = vmatpush1.bf16.msra.mxu0 %v1341
        %1405 = vmatprep.subr.bf16.mxu0 %v1340
        %1406 = vmatpush1.bf16.msra.mxu0 %v1339
        %1407 = vmatprep.subr.bf16.mxu0 %v1338
        %1408 = vmatpush1.bf16.msra.mxu0 %v1337
        %1409 = vmatprep.subr.bf16.mxu0 %v1336
        %1410 = vmatpush1.bf16.msra.mxu0 %v1335
        %1411 = vmatprep.subr.bf16.mxu0 %v1334
        %1412 = vmatpush1.bf16.msra.mxu0 %v1333
        %1413 = vmatprep.subr.bf16.mxu0 %v1364
        %1414 = vmatpush2.bf16.msra.mxu0 %v1363
        %1415 = vmatprep.subr.bf16.mxu0 %v1362
        %1416 = vmatpush2.bf16.msra.mxu0 %v1361
        %1417 = vmatprep.subr.bf16.mxu0 %v1360
        %1418 = vmatpush2.bf16.msra.mxu0 %v1359
        %1419 = vmatprep.subr.bf16.mxu0 %v1358
        %1420 = vmatpush2.bf16.msra.mxu0 %v1357
        %1421 = vmatprep.subr.bf16.mxu0 %v1356
        %1422 = vmatpush2.bf16.msra.mxu0 %v1355
        %1423 = vmatprep.subr.bf16.mxu0 %v1354
        %1424 = vmatpush2.bf16.msra.mxu0 %v1353
        %1425 = vmatprep.subr.bf16.mxu0 %v1352
        %1426 = vmatpush2.bf16.msra.mxu0 %v1351
        %1427 = vmatprep.subr.bf16.mxu0 %v1350
        %1428 = vmatpush2.bf16.msra.mxu0 %v1349
        %1429 = vmatprep.mubr.bf16.mxu0 %v1190
        %1430 = vmatmul.mubr.bf16.gmra.mxu0 %v1189
        %v1431 = vpop.f32.mrf.mxu0
        %v1432 = vadd.f32 0.0, %v1431
        %v1433 = vpop.f32.mrf.mxu0
        %v1434 = vadd.f32 0.0, %v1433
        %v1435 = vpop.f32.mrf.mxu0
        %v1436 = vadd.f32 0.0, %v1435
        %v1437 = vpop.f32.mrf.mxu0
        %v1438 = vadd.f32 0.0, %v1437
        %1439 = vmatprep.mubr.bf16.mxu0 %v1192
        %1440 = vmatmul.mubr.bf16.gmra.mxu0 %v1191
        %v1441 = vpop.f32.mrf.mxu0
        %v1442 = vadd.f32 0.0, %v1441
        %v1443 = vpop.f32.mrf.mxu0
        %v1444 = vadd.f32 0.0, %v1443
        %v1445 = vpop.f32.mrf.mxu0
        %v1446 = vadd.f32 0.0, %v1445
        %v1447 = vpop.f32.mrf.mxu0
        %v1448 = vadd.f32 0.0, %v1447
        %1449 = vmatprep.mubr.bf16.mxu0 %v1194
        %1450 = vmatmul.mubr.bf16.gmra.mxu0 %v1193
        %v1451 = vpop.f32.mrf.mxu0
        %v1452 = vadd.f32 0.0, %v1451
        %v1453 = vpop.f32.mrf.mxu0
        %v1454 = vadd.f32 0.0, %v1453
        %v1455 = vpop.f32.mrf.mxu0
        %v1456 = vadd.f32 0.0, %v1455
        %v1457 = vpop.f32.mrf.mxu0
        %v1458 = vadd.f32 0.0, %v1457
        %1459 = vmatprep.mubr.bf16.mxu0 %v1196
        %1460 = vmatmul.mubr.bf16.gmra.mxu0 %v1195
        %v1461 = vpop.f32.mrf.mxu0
        %v1462 = vadd.f32 0.0, %v1461
        %v1463 = vpop.f32.mrf.mxu0
        %v1464 = vadd.f32 0.0, %v1463
        %v1465 = vpop.f32.mrf.mxu0
        %v1466 = vadd.f32 0.0, %v1465
        %v1467 = vpop.f32.mrf.mxu0
        %v1468 = vadd.f32 0.0, %v1467
        %1469 = vmatprep.mubr.bf16.mxu0 %v1198
        %1470 = vmatmul.mubr.bf16.gmra.mxu0 %v1197
        %v1471 = vpop.f32.mrf.mxu0
        %v1472 = vadd.f32 0.0, %v1471
        %v1473 = vpop.f32.mrf.mxu0
        %v1474 = vadd.f32 0.0, %v1473
        %v1475 = vpop.f32.mrf.mxu0
        %v1476 = vadd.f32 0.0, %v1475
        %v1477 = vpop.f32.mrf.mxu0
        %v1478 = vadd.f32 0.0, %v1477
        %1479 = vmatprep.mubr.bf16.mxu0 %v1200
        %1480 = vmatmul.mubr.bf16.gmra.mxu0 %v1199
        %v1481 = vpop.f32.mrf.mxu0
        %v1482 = vadd.f32 0.0, %v1481
        %v1483 = vpop.f32.mrf.mxu0
        %v1484 = vadd.f32 0.0, %v1483
        %v1485 = vpop.f32.mrf.mxu0
        %v1486 = vadd.f32 0.0, %v1485
        %v1487 = vpop.f32.mrf.mxu0
        %v1488 = vadd.f32 0.0, %v1487
        %1489 = vmatprep.mubr.bf16.mxu0 %v1202
        %1490 = vmatmul.mubr.bf16.gmra.mxu0 %v1201
        %v1491 = vpop.f32.mrf.mxu0
        %v1492 = vadd.f32 0.0, %v1491
        %v1493 = vpop.f32.mrf.mxu0
        %v1494 = vadd.f32 0.0, %v1493
        %v1495 = vpop.f32.mrf.mxu0
        %v1496 = vadd.f32 0.0, %v1495
        %v1497 = vpop.f32.mrf.mxu0
        %v1498 = vadd.f32 0.0, %v1497
        %1499 = vmatprep.mubr.bf16.mxu0 %v1204
        %1500 = vmatmul.mubr.bf16.gmra.mxu0 %v1203
        %v1501 = vpop.f32.mrf.mxu0
        %v1502 = vadd.f32 0.0, %v1501
        %v1503 = vpop.f32.mrf.mxu0
        %v1504 = vadd.f32 0.0, %v1503
        %v1505 = vpop.f32.mrf.mxu0
        %v1506 = vadd.f32 0.0, %v1505
        %v1507 = vpop.f32.mrf.mxu0
        %v1508 = vadd.f32 0.0, %v1507
        %1509 = vdwg.mxu0
        %v1510 = vadd.f32 %v1157, %v1432
        %v1511 = vadd.f32 %v1158, %v1434
        %v1512 = vadd.f32 %v1159, %v1436
        %v1513 = vadd.f32 %v1160, %v1438
        %v1514 = vadd.f32 %v1161, %v1442
        %v1515 = vadd.f32 %v1162, %v1444
        %v1516 = vadd.f32 %v1163, %v1446
        %v1517 = vadd.f32 %v1164, %v1448
        %v1518 = vadd.f32 %v1165, %v1452
        %v1519 = vadd.f32 %v1166, %v1454
        %v1520 = vadd.f32 %v1167, %v1456
        %v1521 = vadd.f32 %v1168, %v1458
        %v1522 = vadd.f32 %v1169, %v1462
        %v1523 = vadd.f32 %v1170, %v1464
        %v1524 = vadd.f32 %v1171, %v1466
        %v1525 = vadd.f32 %v1172, %v1468
        %v1526 = vadd.f32 %v1173, %v1472
        %v1527 = vadd.f32 %v1174, %v1474
        %v1528 = vadd.f32 %v1175, %v1476
        %v1529 = vadd.f32 %v1176, %v1478
        %v1530 = vadd.f32 %v1177, %v1482
        %v1531 = vadd.f32 %v1178, %v1484
        %v1532 = vadd.f32 %v1179, %v1486
        %v1533 = vadd.f32 %v1180, %v1488
        %v1534 = vadd.f32 %v1181, %v1492
        %v1535 = vadd.f32 %v1182, %v1494
        %v1536 = vadd.f32 %v1183, %v1496
        %v1537 = vadd.f32 %v1184, %v1498
        %v1538 = vadd.f32 %v1185, %v1502
        %v1539 = vadd.f32 %v1186, %v1504
        %v1540 = vadd.f32 %v1187, %v1506
        %v1541 = vadd.f32 %v1188, %v1508
        %1542 = vst [vmem:[#allocation2] sm:$0xff] %v1510
        %1543 = vst [vmem:[#allocation2 + $0x8] sm:$0xff] %v1511
        %1544 = vst [vmem:[#allocation2 + $0x10] sm:$0xff] %v1512
        %1545 = vst [vmem:[#allocation2 + $0x18] sm:$0xff] %v1513
        %1546 = vst [vmem:[#allocation2 + $0x20] sm:$0xff] %v1514
        %1547 = vst [vmem:[#allocation2 + $0x28] sm:$0xff] %v1515
        %1548 = vst [vmem:[#allocation2 + $0x30] sm:$0xff] %v1516
        %1549 = vst [vmem:[#allocation2 + $0x38] sm:$0xff] %v1517
        %1550 = vst [vmem:[#allocation2 + $0x40] sm:$0xff] %v1518
        %1551 = vst [vmem:[#allocation2 + $0x48] sm:$0xff] %v1519
        %1552 = vst [vmem:[#allocation2 + $0x50] sm:$0xff] %v1520
        %1553 = vst [vmem:[#allocation2 + $0x58] sm:$0xff] %v1521
        %1554 = vst [vmem:[#allocation2 + $0x60] sm:$0xff] %v1522
        %1555 = vst [vmem:[#allocation2 + $0x68] sm:$0xff] %v1523
        %1556 = vst [vmem:[#allocation2 + $0x70] sm:$0xff] %v1524
        %1557 = vst [vmem:[#allocation2 + $0x78] sm:$0xff] %v1525
        %1558 = vst [vmem:[#allocation2 + $0x80] sm:$0xff] %v1526
        %1559 = vst [vmem:[#allocation2 + $0x88] sm:$0xff] %v1527
        %1560 = vst [vmem:[#allocation2 + $0x90] sm:$0xff] %v1528
        %1561 = vst [vmem:[#allocation2 + $0x98] sm:$0xff] %v1529
        %1562 = vst [vmem:[#allocation2 + $0xa0] sm:$0xff] %v1530
        %1563 = vst [vmem:[#allocation2 + $0xa8] sm:$0xff] %v1531
        %1564 = vst [vmem:[#allocation2 + $0xb0] sm:$0xff] %v1532
        %1565 = vst [vmem:[#allocation2 + $0xb8] sm:$0xff] %v1533
        %1566 = vst [vmem:[#allocation2 + $0xc0] sm:$0xff] %v1534
        %1567 = vst [vmem:[#allocation2 + $0xc8] sm:$0xff] %v1535
        %1568 = vst [vmem:[#allocation2 + $0xd0] sm:$0xff] %v1536
        %1569 = vst [vmem:[#allocation2 + $0xd8] sm:$0xff] %v1537
        %1570 = vst [vmem:[#allocation2 + $0xe0] sm:$0xff] %v1538
        %1571 = vst [vmem:[#allocation2 + $0xe8] sm:$0xff] %v1539
        %1572 = vst [vmem:[#allocation2 + $0xf0] sm:$0xff] %v1540
        %1573 = vst [vmem:[#allocation2 + $0xf8] sm:$0xff] %v1541
        %p1574 = scmp.eq.s32.totalorder %s31, 1
        // Predicated region
        $region83: #{sae_forward.1} parent=73 // pred_check
          %p1575 = pneg %p1574
        $region84: #{sae_forward.1} parent=73 // pred_check_branch
          %1577 = sbr.rel (%p1575) target = $region86
        $region85: #{sae_forward.1} parent=73 // pred_region
          %v1578 = vld [vmem:[#allocation2] sm:$0xff]
          %v1579 = vld [vmem:[#allocation2 + $0x8] sm:$0xff]
          %v1580 = vld [vmem:[#allocation2 + $0x10] sm:$0xff]
          %v1581 = vld [vmem:[#allocation2 + $0x18] sm:$0xff]
          %v1582 = vld [vmem:[#allocation2 + $0x20] sm:$0xff]
          %v1583 = vld [vmem:[#allocation2 + $0x28] sm:$0xff]
          %v1584 = vld [vmem:[#allocation2 + $0x30] sm:$0xff]
          %v1585 = vld [vmem:[#allocation2 + $0x38] sm:$0xff]
          %v1586 = vld [vmem:[#allocation2 + $0x40] sm:$0xff]
          %v1587 = vld [vmem:[#allocation2 + $0x48] sm:$0xff]
          %v1588 = vld [vmem:[#allocation2 + $0x50] sm:$0xff]
          %v1589 = vld [vmem:[#allocation2 + $0x58] sm:$0xff]
          %v1590 = vld [vmem:[#allocation2 + $0x60] sm:$0xff]
          %v1591 = vld [vmem:[#allocation2 + $0x68] sm:$0xff]
          %v1592 = vld [vmem:[#allocation2 + $0x70] sm:$0xff]
          %v1593 = vld [vmem:[#allocation2 + $0x78] sm:$0xff]
          %v1594 = vld [vmem:[#allocation2 + $0x80] sm:$0xff]
          %v1595 = vld [vmem:[#allocation2 + $0x88] sm:$0xff]
          %v1596 = vld [vmem:[#allocation2 + $0x90] sm:$0xff]
          %v1597 = vld [vmem:[#allocation2 + $0x98] sm:$0xff]
          %v1598 = vld [vmem:[#allocation2 + $0xa0] sm:$0xff]
          %v1599 = vld [vmem:[#allocation2 + $0xa8] sm:$0xff]
          %v1600 = vld [vmem:[#allocation2 + $0xb0] sm:$0xff]
          %v1601 = vld [vmem:[#allocation2 + $0xb8] sm:$0xff]
          %v1602 = vld [vmem:[#allocation2 + $0xc0] sm:$0xff]
          %v1603 = vld [vmem:[#allocation2 + $0xc8] sm:$0xff]
          %v1604 = vld [vmem:[#allocation2 + $0xd0] sm:$0xff]
          %v1605 = vld [vmem:[#allocation2 + $0xd8] sm:$0xff]
          %v1606 = vld [vmem:[#allocation2 + $0xe0] sm:$0xff]
          %v1607 = vld [vmem:[#allocation2 + $0xe8] sm:$0xff]
          %v1608 = vld [vmem:[#allocation2 + $0xf0] sm:$0xff]
          %v1609 = vld [vmem:[#allocation2 + $0xf8] sm:$0xff]
          %v1610 = vld [vmem:[%s4] sm:$0x3]
          %v1612 = vlaneseq
          %v1613 = vshrl.u32 %v1612, 7
          %v1614 = vsub.s32 0, %v1613
          %v1615 = vrot.slane %v1610, %v1614
          %v1616 = vlaneseq
          %v1617 = vshrl.u32 %v1616, 7
          %v1618 = vsub.s32 1, %v1617
          %v1619 = vrot.slane %v1610, %v1618
          %v1622 = vadd.f32 %v1578, %v1615
          %v1623 = vadd.f32 %v1579, %v1619
          %v1624 = vadd.f32 %v1580, %v1615
          %v1625 = vadd.f32 %v1581, %v1619
          %v1626 = vadd.f32 %v1582, %v1615
          %v1627 = vadd.f32 %v1583, %v1619
          %v1628 = vadd.f32 %v1584, %v1615
          %v1629 = vadd.f32 %v1585, %v1619
          %v1630 = vadd.f32 %v1586, %v1615
          %v1631 = vadd.f32 %v1587, %v1619
          %v1632 = vadd.f32 %v1588, %v1615
          %v1633 = vadd.f32 %v1589, %v1619
          %v1634 = vadd.f32 %v1590, %v1615
          %v1635 = vadd.f32 %v1591, %v1619
          %v1636 = vadd.f32 %v1592, %v1615
          %v1637 = vadd.f32 %v1593, %v1619
          %v1638 = vadd.f32 %v1594, %v1615
          %v1639 = vadd.f32 %v1595, %v1619
          %v1640 = vadd.f32 %v1596, %v1615
          %v1641 = vadd.f32 %v1597, %v1619
          %v1642 = vadd.f32 %v1598, %v1615
          %v1643 = vadd.f32 %v1599, %v1619
          %v1644 = vadd.f32 %v1600, %v1615
          %v1645 = vadd.f32 %v1601, %v1619
          %v1646 = vadd.f32 %v1602, %v1615
          %v1647 = vadd.f32 %v1603, %v1619
          %v1648 = vadd.f32 %v1604, %v1615
          %v1649 = vadd.f32 %v1605, %v1619
          %v1650 = vadd.f32 %v1606, %v1615
          %v1651 = vadd.f32 %v1607, %v1619
          %v1652 = vadd.f32 %v1608, %v1615
          %v1653 = vadd.f32 %v1609, %v1619
          %1654 = vst [vmem:[%s531] sm:$0xff] %v1622
          %1655 = vst [vmem:[%s531 + $0x8] sm:$0xff] %v1623
          %1656 = vst [vmem:[%s531 + $0x10] sm:$0xff] %v1624
          %1657 = vst [vmem:[%s531 + $0x18] sm:$0xff] %v1625
          %1658 = vst [vmem:[%s531 + $0x20] sm:$0xff] %v1626
          %1659 = vst [vmem:[%s531 + $0x28] sm:$0xff] %v1627
          %1660 = vst [vmem:[%s531 + $0x30] sm:$0xff] %v1628
          %1661 = vst [vmem:[%s531 + $0x38] sm:$0xff] %v1629
          %1662 = vst [vmem:[%s531 + $0x40] sm:$0xff] %v1630
          %1663 = vst [vmem:[%s531 + $0x48] sm:$0xff] %v1631
          %1664 = vst [vmem:[%s531 + $0x50] sm:$0xff] %v1632
          %1665 = vst [vmem:[%s531 + $0x58] sm:$0xff] %v1633
          %1666 = vst [vmem:[%s531 + $0x60] sm:$0xff] %v1634
          %1667 = vst [vmem:[%s531 + $0x68] sm:$0xff] %v1635
          %1668 = vst [vmem:[%s531 + $0x70] sm:$0xff] %v1636
          %1669 = vst [vmem:[%s531 + $0x78] sm:$0xff] %v1637
          %1670 = vst [vmem:[%s531 + $0x80] sm:$0xff] %v1638
          %1671 = vst [vmem:[%s531 + $0x88] sm:$0xff] %v1639
          %1672 = vst [vmem:[%s531 + $0x90] sm:$0xff] %v1640
          %1673 = vst [vmem:[%s531 + $0x98] sm:$0xff] %v1641
          %1674 = vst [vmem:[%s531 + $0xa0] sm:$0xff] %v1642
          %1675 = vst [vmem:[%s531 + $0xa8] sm:$0xff] %v1643
          %1676 = vst [vmem:[%s531 + $0xb0] sm:$0xff] %v1644
          %1677 = vst [vmem:[%s531 + $0xb8] sm:$0xff] %v1645
          %1678 = vst [vmem:[%s531 + $0xc0] sm:$0xff] %v1646
          %1679 = vst [vmem:[%s531 + $0xc8] sm:$0xff] %v1647
          %1680 = vst [vmem:[%s531 + $0xd0] sm:$0xff] %v1648
          %1681 = vst [vmem:[%s531 + $0xd8] sm:$0xff] %v1649
          %1682 = vst [vmem:[%s531 + $0xe0] sm:$0xff] %v1650
          %1683 = vst [vmem:[%s531 + $0xe8] sm:$0xff] %v1651
          %1684 = vst [vmem:[%s531 + $0xf0] sm:$0xff] %v1652
          %1685 = vst [vmem:[%s531 + $0xf8] sm:$0xff] %v1653
          %v1686 = vsub.f32 %v1622, %v631
          %v1687 = vsub.f32 %v1623, %v632
          %v1688 = vsub.f32 %v1624, %v633
          %v1689 = vsub.f32 %v1625, %v634
          %v1690 = vsub.f32 %v1626, %v635
          %v1691 = vsub.f32 %v1627, %v636
          %v1692 = vsub.f32 %v1628, %v637
          %v1693 = vsub.f32 %v1629, %v638
          %v1694 = vsub.f32 %v1630, %v639
          %v1695 = vsub.f32 %v1631, %v640
          %v1696 = vsub.f32 %v1632, %v641
          %v1697 = vsub.f32 %v1633, %v642
          %v1698 = vsub.f32 %v1634, %v643
          %v1699 = vsub.f32 %v1635, %v644
          %v1700 = vsub.f32 %v1636, %v645
          %v1701 = vsub.f32 %v1637, %v646
          %v1702 = vsub.f32 %v1638, %v647
          %v1703 = vsub.f32 %v1639, %v648
          %v1704 = vsub.f32 %v1640, %v649
          %v1705 = vsub.f32 %v1641, %v650
          %v1706 = vsub.f32 %v1642, %v651
          %v1707 = vsub.f32 %v1643, %v652
          %v1708 = vsub.f32 %v1644, %v653
          %v1709 = vsub.f32 %v1645, %v654
          %v1710 = vsub.f32 %v1646, %v655
          %v1711 = vsub.f32 %v1647, %v656
          %v1712 = vsub.f32 %v1648, %v657
          %v1713 = vsub.f32 %v1649, %v658
          %v1714 = vsub.f32 %v1650, %v659
          %v1715 = vsub.f32 %v1651, %v660
          %v1716 = vsub.f32 %v1652, %v661
          %v1717 = vsub.f32 %v1653, %v662
          %v1718 = vmul.f32 %v1686, %v1686
          %v1719 = vmul.f32 %v1687, %v1687
          %v1720 = vmul.f32 %v1688, %v1688
          %v1721 = vmul.f32 %v1689, %v1689
          %v1722 = vmul.f32 %v1690, %v1690
          %v1723 = vmul.f32 %v1691, %v1691
          %v1724 = vmul.f32 %v1692, %v1692
          %v1725 = vmul.f32 %v1693, %v1693
          %v1726 = vmul.f32 %v1694, %v1694
          %v1727 = vmul.f32 %v1695, %v1695
          %v1728 = vmul.f32 %v1696, %v1696
          %v1729 = vmul.f32 %v1697, %v1697
          %v1730 = vmul.f32 %v1698, %v1698
          %v1731 = vmul.f32 %v1699, %v1699
          %v1732 = vmul.f32 %v1700, %v1700
          %v1733 = vmul.f32 %v1701, %v1701
          %v1734 = vmul.f32 %v1702, %v1702
          %v1735 = vmul.f32 %v1703, %v1703
          %v1736 = vmul.f32 %v1704, %v1704
          %v1737 = vmul.f32 %v1705, %v1705
          %v1738 = vmul.f32 %v1706, %v1706
          %v1739 = vmul.f32 %v1707, %v1707
          %v1740 = vmul.f32 %v1708, %v1708
          %v1741 = vmul.f32 %v1709, %v1709
          %v1742 = vmul.f32 %v1710, %v1710
          %v1743 = vmul.f32 %v1711, %v1711
          %v1744 = vmul.f32 %v1712, %v1712
          %v1745 = vmul.f32 %v1713, %v1713
          %v1746 = vmul.f32 %v1714, %v1714
          %v1747 = vmul.f32 %v1715, %v1715
          %v1748 = vmul.f32 %v1716, %v1716
          %v1749 = vmul.f32 %v1717, %v1717
          %v1750 = vadd.f32 %v1718, %v1719
          %1751 = vadd.xlane.f32.xlu0 %v1750
          %v1752 = vpop.xlane.xlu0 %1751
          %v1753 = vadd.f32 %v1720, %v1721
          %1754 = vadd.xlane.f32.xlu0 %v1753
          %v1755 = vpop.xlane.xlu0 %1754
          %v1756 = vadd.f32 %v1722, %v1723
          %1757 = vadd.xlane.f32.xlu0 %v1756
          %v1758 = vpop.xlane.xlu0 %1757
          %v1759 = vadd.f32 %v1724, %v1725
          %1760 = vadd.xlane.f32.xlu0 %v1759
          %v1761 = vpop.xlane.xlu0 %1760
          %v1762 = vadd.f32 %v1726, %v1727
          %1763 = vadd.xlane.f32.xlu0 %v1762
          %v1764 = vpop.xlane.xlu0 %1763
          %v1765 = vadd.f32 %v1728, %v1729
          %1766 = vadd.xlane.f32.xlu0 %v1765
          %v1767 = vpop.xlane.xlu0 %1766
          %v1768 = vadd.f32 %v1730, %v1731
          %1769 = vadd.xlane.f32.xlu0 %v1768
          %v1770 = vpop.xlane.xlu0 %1769
          %v1771 = vadd.f32 %v1732, %v1733
          %1772 = vadd.xlane.f32.xlu0 %v1771
          %v1773 = vpop.xlane.xlu0 %1772
          %v1774 = vadd.f32 %v1734, %v1735
          %1775 = vadd.xlane.f32.xlu0 %v1774
          %v1776 = vpop.xlane.xlu0 %1775
          %v1777 = vadd.f32 %v1736, %v1737
          %1778 = vadd.xlane.f32.xlu0 %v1777
          %v1779 = vpop.xlane.xlu0 %1778
          %v1780 = vadd.f32 %v1738, %v1739
          %1781 = vadd.xlane.f32.xlu0 %v1780
          %v1782 = vpop.xlane.xlu0 %1781
          %v1783 = vadd.f32 %v1740, %v1741
          %1784 = vadd.xlane.f32.xlu0 %v1783
          %v1785 = vpop.xlane.xlu0 %1784
          %v1786 = vadd.f32 %v1742, %v1743
          %1787 = vadd.xlane.f32.xlu0 %v1786
          %v1788 = vpop.xlane.xlu0 %1787
          %v1789 = vadd.f32 %v1744, %v1745
          %1790 = vadd.xlane.f32.xlu0 %v1789
          %v1791 = vpop.xlane.xlu0 %1790
          %v1792 = vadd.f32 %v1746, %v1747
          %1793 = vadd.xlane.f32.xlu0 %v1792
          %v1794 = vpop.xlane.xlu0 %1793
          %v1795 = vadd.f32 %v1748, %v1749
          %1796 = vadd.xlane.f32.xlu0 %v1795
          %v1797 = vpop.xlane.xlu0 %1796
          %v1798 = vmul.f32 %v631, %v631
          %v1799 = vmul.f32 %v632, %v632
          %v1800 = vmul.f32 %v633, %v633
          %v1801 = vmul.f32 %v634, %v634
          %v1802 = vmul.f32 %v635, %v635
          %v1803 = vmul.f32 %v636, %v636
          %v1804 = vmul.f32 %v637, %v637
          %v1805 = vmul.f32 %v638, %v638
          %v1806 = vmul.f32 %v639, %v639
          %v1807 = vmul.f32 %v640, %v640
          %v1808 = vmul.f32 %v641, %v641
          %v1809 = vmul.f32 %v642, %v642
          %v1810 = vmul.f32 %v643, %v643
          %v1811 = vmul.f32 %v644, %v644
          %v1812 = vmul.f32 %v645, %v645
          %v1813 = vmul.f32 %v646, %v646
          %v1814 = vmul.f32 %v647, %v647
          %v1815 = vmul.f32 %v648, %v648
          %v1816 = vmul.f32 %v649, %v649
          %v1817 = vmul.f32 %v650, %v650
          %v1818 = vmul.f32 %v651, %v651
          %v1819 = vmul.f32 %v652, %v652
          %v1820 = vmul.f32 %v653, %v653
          %v1821 = vmul.f32 %v654, %v654
          %v1822 = vmul.f32 %v655, %v655
          %v1823 = vmul.f32 %v656, %v656
          %v1824 = vmul.f32 %v657, %v657
          %v1825 = vmul.f32 %v658, %v658
          %v1826 = vmul.f32 %v659, %v659
          %v1827 = vmul.f32 %v660, %v660
          %v1828 = vmul.f32 %v661, %v661
          %v1829 = vmul.f32 %v662, %v662
          %v1830 = vadd.f32 %v1798, %v1799
          %1831 = vadd.xlane.f32.xlu0 %v1830
          %v1832 = vpop.xlane.xlu0 %1831
          %v1833 = vadd.f32 %v1800, %v1801
          %1834 = vadd.xlane.f32.xlu0 %v1833
          %v1835 = vpop.xlane.xlu0 %1834
          %v1836 = vadd.f32 %v1802, %v1803
          %1837 = vadd.xlane.f32.xlu0 %v1836
          %v1838 = vpop.xlane.xlu0 %1837
          %v1839 = vadd.f32 %v1804, %v1805
          %1840 = vadd.xlane.f32.xlu0 %v1839
          %v1841 = vpop.xlane.xlu0 %1840
          %v1842 = vadd.f32 %v1806, %v1807
          %1843 = vadd.xlane.f32.xlu0 %v1842
          %v1844 = vpop.xlane.xlu0 %1843
          %v1845 = vadd.f32 %v1808, %v1809
          %1846 = vadd.xlane.f32.xlu0 %v1845
          %v1847 = vpop.xlane.xlu0 %1846
          %v1848 = vadd.f32 %v1810, %v1811
          %1849 = vadd.xlane.f32.xlu0 %v1848
          %v1850 = vpop.xlane.xlu0 %1849
          %v1851 = vadd.f32 %v1812, %v1813
          %1852 = vadd.xlane.f32.xlu0 %v1851
          %v1853 = vpop.xlane.xlu0 %1852
          %v1854 = vadd.f32 %v1814, %v1815
          %1855 = vadd.xlane.f32.xlu0 %v1854
          %v1856 = vpop.xlane.xlu0 %1855
          %v1857 = vadd.f32 %v1816, %v1817
          %1858 = vadd.xlane.f32.xlu0 %v1857
          %v1859 = vpop.xlane.xlu0 %1858
          %v1860 = vadd.f32 %v1818, %v1819
          %1861 = vadd.xlane.f32.xlu0 %v1860
          %v1862 = vpop.xlane.xlu0 %1861
          %v1863 = vadd.f32 %v1820, %v1821
          %1864 = vadd.xlane.f32.xlu0 %v1863
          %v1865 = vpop.xlane.xlu0 %1864
          %v1866 = vadd.f32 %v1822, %v1823
          %1867 = vadd.xlane.f32.xlu0 %v1866
          %v1868 = vpop.xlane.xlu0 %1867
          %v1869 = vadd.f32 %v1824, %v1825
          %1870 = vadd.xlane.f32.xlu0 %v1869
          %v1871 = vpop.xlane.xlu0 %1870
          %v1872 = vadd.f32 %v1826, %v1827
          %1873 = vadd.xlane.f32.xlu0 %v1872
          %v1874 = vpop.xlane.xlu0 %1873
          %v1875 = vadd.f32 %v1828, %v1829
          %1876 = vadd.xlane.f32.xlu0 %v1875
          %v1877 = vpop.xlane.xlu0 %1876
          %v1878 = vrsqrt.pop %v1832
          %v1879 = vrsqrt.pop %v1835
          %v1880 = vrsqrt.pop %v1838
          %v1881 = vrsqrt.pop %v1841
          %v1882 = vrsqrt.pop %v1844
          %v1883 = vrsqrt.pop %v1847
          %v1884 = vrsqrt.pop %v1850
          %v1885 = vrsqrt.pop %v1853
          %v1886 = vrsqrt.pop %v1856
          %v1887 = vrsqrt.pop %v1859
          %v1888 = vrsqrt.pop %v1862
          %v1889 = vrsqrt.pop %v1865
          %v1890 = vrsqrt.pop %v1868
          %v1891 = vrsqrt.pop %v1871
          %v1892 = vrsqrt.pop %v1874
          %v1893 = vrsqrt.pop %v1877
          %v1894 = vmul.f32 %v1752, %v1878
          %v1895 = vmul.f32 %v1755, %v1879
          %v1896 = vmul.f32 %v1758, %v1880
          %v1897 = vmul.f32 %v1761, %v1881
          %v1898 = vmul.f32 %v1764, %v1882
          %v1899 = vmul.f32 %v1767, %v1883
          %v1900 = vmul.f32 %v1770, %v1884
          %v1901 = vmul.f32 %v1773, %v1885
          %v1902 = vmul.f32 %v1776, %v1886
          %v1903 = vmul.f32 %v1779, %v1887
          %v1904 = vmul.f32 %v1782, %v1888
          %v1905 = vmul.f32 %v1785, %v1889
          %v1906 = vmul.f32 %v1788, %v1890
          %v1907 = vmul.f32 %v1791, %v1891
          %v1908 = vmul.f32 %v1794, %v1892
          %v1909 = vmul.f32 %v1797, %v1893
          %v1910 = vsel %vm1140, %v1894, 0.0
          %v1911 = vsel %vm1140, %v1895, 0.0
          %v1912 = vadd.f32 %v1910, %v1911
          %v1913 = vsel %vm1140, %v1896, 0.0
          %v1914 = vadd.f32 %v1912, %v1913
          %v1915 = vsel %vm1140, %v1897, 0.0
          %v1916 = vadd.f32 %v1914, %v1915
          %v1917 = vsel %vm1140, %v1898, 0.0
          %v1918 = vadd.f32 %v1916, %v1917
          %v1919 = vsel %vm1140, %v1899, 0.0
          %v1920 = vadd.f32 %v1918, %v1919
          %v1921 = vsel %vm1140, %v1900, 0.0
          %v1922 = vadd.f32 %v1920, %v1921
          %v1923 = vsel %vm1140, %v1901, 0.0
          %v1924 = vadd.f32 %v1922, %v1923
          %v1925 = vsel %vm1140, %v1902, 0.0
          %v1926 = vadd.f32 %v1924, %v1925
          %v1927 = vsel %vm1140, %v1903, 0.0
          %v1928 = vadd.f32 %v1926, %v1927
          %v1929 = vsel %vm1140, %v1904, 0.0
          %v1930 = vadd.f32 %v1928, %v1929
          %v1931 = vsel %vm1140, %v1905, 0.0
          %v1932 = vadd.f32 %v1930, %v1931
          %v1933 = vsel %vm1140, %v1906, 0.0
          %v1934 = vadd.f32 %v1932, %v1933
          %v1935 = vsel %vm1140, %v1907, 0.0
          %v1936 = vadd.f32 %v1934, %v1935
          %v1937 = vsel %vm1140, %v1908, 0.0
          %v1938 = vadd.f32 %v1936, %v1937
          %v1939 = vsel %vm1140, %v1909, 0.0
          %v1940 = vadd.f32 %v1938, %v1939
          %1941 = vadd.xlane.f32.xlu0 %v1940
          %v1942 = vpop.xlane.xlu0 %1941
          %v1943 = vrot.slane %v1942, 4
          %v1944 = vadd.f32 %v1942, %v1943
          %v1945 = vrot.slane %v1944, 2
          %v1946 = vadd.f32 %v1944, %v1945
          %v1947 = vrot.slane %v1946, 1
          %v1948 = vadd.f32 %v1946, %v1947
          %s1949 = vtos %v1948
          %v1950 = vld [vmem:[#allocation3] sm:$0xff]
          %v1951 = vld [vmem:[#allocation3 + $0x8] sm:$0xff]
          %v1952 = vld [vmem:[#allocation3 + $0x10] sm:$0xff]
          %v1953 = vld [vmem:[#allocation3 + $0x18] sm:$0xff]
          %v1954 = vld [vmem:[#allocation3 + $0x20] sm:$0xff]
          %v1955 = vld [vmem:[#allocation3 + $0x28] sm:$0xff]
          %v1956 = vld [vmem:[#allocation3 + $0x30] sm:$0xff]
          %v1957 = vld [vmem:[#allocation3 + $0x38] sm:$0xff]
          %v1958 = vld [vmem:[#allocation3 + $0x40] sm:$0xff]
          %v1959 = vld [vmem:[#allocation3 + $0x48] sm:$0xff]
          %v1960 = vld [vmem:[#allocation3 + $0x50] sm:$0xff]
          %v1961 = vld [vmem:[#allocation3 + $0x58] sm:$0xff]
          %v1962 = vld [vmem:[#allocation3 + $0x60] sm:$0xff]
          %v1963 = vld [vmem:[#allocation3 + $0x68] sm:$0xff]
          %v1964 = vld [vmem:[#allocation3 + $0x70] sm:$0xff]
          %v1965 = vld [vmem:[#allocation3 + $0x78] sm:$0xff]
          %v1966 = vsel %vm1140, %v1950, 0.0
          %v1967 = vsel %vm1140, %v1951, 0.0
          %v1968 = vadd.f32 %v1966, %v1967
          %v1969 = vsel %vm1140, %v1952, 0.0
          %v1970 = vadd.f32 %v1968, %v1969
          %v1971 = vsel %vm1140, %v1953, 0.0
          %v1972 = vadd.f32 %v1970, %v1971
          %v1973 = vsel %vm1140, %v1954, 0.0
          %v1974 = vadd.f32 %v1972, %v1973
          %v1975 = vsel %vm1140, %v1955, 0.0
          %v1976 = vadd.f32 %v1974, %v1975
          %v1977 = vsel %vm1140, %v1956, 0.0
          %v1978 = vadd.f32 %v1976, %v1977
          %v1979 = vsel %vm1140, %v1957, 0.0
          %v1980 = vadd.f32 %v1978, %v1979
          %v1981 = vsel %vm1140, %v1958, 0.0
          %v1982 = vadd.f32 %v1980, %v1981
          %v1983 = vsel %vm1140, %v1959, 0.0
          %v1984 = vadd.f32 %v1982, %v1983
          %v1985 = vsel %vm1140, %v1960, 0.0
          %v1986 = vadd.f32 %v1984, %v1985
          %v1987 = vsel %vm1140, %v1961, 0.0
          %v1988 = vadd.f32 %v1986, %v1987
          %v1989 = vsel %vm1140, %v1962, 0.0
          %v1990 = vadd.f32 %v1988, %v1989
          %v1991 = vsel %vm1140, %v1963, 0.0
          %v1992 = vadd.f32 %v1990, %v1991
          %v1993 = vsel %vm1140, %v1964, 0.0
          %v1994 = vadd.f32 %v1992, %v1993
          %v1995 = vsel %vm1140, %v1965, 0.0
          %v1996 = vadd.f32 %v1994, %v1995
          %1997 = vadd.xlane.f32.xlu0 %v1996
          %v1998 = vpop.xlane.xlu0 %1997
          %v1999 = vrot.slane %v1998, 4
          %v2000 = vadd.f32 %v1998, %v1999
          %v2001 = vrot.slane %v2000, 2
          %v2002 = vadd.f32 %v2000, %v2001
          %v2003 = vrot.slane %v2002, 1
          %v2004 = vadd.f32 %v2002, %v2003
          %s2005 = vtos %v2004
          %v2006 = vstv %s1949
          %2007 = vst [vmem:[%s574] sm:$0x1] %v2006
          %v2008 = vstv %s2005
          %2009 = vst [vmem:[%s577] sm:$0x1] %v2008
        $region86: #{sae_forward.1} parent=73 // pred_fallthru
          _
        %s2010 = sand.u32 %s171, 1
        %s2011 = scalar_lea.sflag [#allocation6], %s2010
        %s2012 = sand.u32 %s171, 1
        %s2013 = smul.addr %s2012, 256
        %s2014 = scalar_lea.vmem [#allocation5], %s2013
        %s2015 = sand.u32 %s199, 1
        %s2016 = scalar_lea.sflag [#allocation8], %s2015
        %s2017 = sand.u32 %s199, 1
        %s2018 = smul.addr %s2017, 256
        %s2019 = scalar_lea.vmem [#allocation7], %s2018
        %p2020 = scmp.lt.s32.totalorder %s30, 1
        %s2021 = scalar_select %p2020, %s30, 1
        %s2022 = scalar_lea.vmem %s7, %s2021
        %p2023 = scmp.lt.s32.totalorder %s30, 1
        %s2024 = scalar_select %p2023, %s30, 1
        %s2025 = scalar_lea.vmem %s8, %s2024
        // Predicated region
        $region87: #{sae_forward.1} parent=73 // pred_check
          %p2026 = pneg %p181
        $region88: #{sae_forward.1} parent=73 // pred_check_branch
          %2028 = sbr.rel (%p2026) target = $region90
        $region89: #{sae_forward.1} parent=73 // pred_region
          %s2029 = smul.u32 16, %s30
          %s2031 = ssub.s32 4096, 4096
          %2032 = vsyncadd %s2011, %s2031
          %s2033 = smul.addr %s2029, 2
          %s2034 = smul.addr %s2033, 128
          %s2035 = scalar_lea.hbm %s5, %s2034
          %s2036 = sshll.u32 %s2014, 4
          %s2037 = int_to_ptr.vmem [resolvable:$true] %s2036
          %2042 = dma.vmem_to_hbm [thread:$0]  %s2037, 4096, %s2035, %s2011, 256, 256, 16
        $region90: #{sae_forward.1} parent=73 // pred_fallthru
          _
        // Predicated region
        $region91: #{sae_forward.1} parent=73 // pred_check
          %p2043 = pneg %p209
        $region92: #{sae_forward.1} parent=73 // pred_check_branch
          %2045 = sbr.rel (%p2043) target = $region94
        $region93: #{sae_forward.1} parent=73 // pred_region
          %s2046 = smul.u32 16, %s30
          %s2047 = smul.u32 2, %s31
          %s2049 = ssub.s32 4096, 4096
          %2050 = vsyncadd %s2016, %s2049
          %s2051 = smul.addr %s2046, 4
          %s2052 = sadd.s32 %s2047, %s2051
          %s2053 = smul.addr %s2052, 128
          %s2054 = scalar_lea.hbm %s6, %s2053
          %s2055 = sshll.u32 %s2019, 4
          %s2056 = int_to_ptr.vmem [resolvable:$true] %s2055
          %2061 = dma.vmem_to_hbm [thread:$0]  %s2056, 4096, %s2054, %s2016, 256, 512, 16
        $region94: #{sae_forward.1} parent=73 // pred_fallthru
          _
        // Predicated region
        $region95: #{sae_forward.1} parent=73 // pred_check
          %p2062 = pneg %p235
        $region96: #{sae_forward.1} parent=73 // pred_check_branch
          %2064 = sbr.rel (%p2062) target = $region98
        $region97: #{sae_forward.1} parent=73 // pred_region
          _
        $region98: #{sae_forward.1} parent=73 // pred_fallthru
          _
        // Predicated region
        $region99: #{sae_forward.1} parent=73 // pred_check
          %p2065 = pneg %p261
        $region100: #{sae_forward.1} parent=73 // pred_check_branch
          %2067 = sbr.rel (%p2065) target = $region102
        $region101: #{sae_forward.1} parent=73 // pred_region
          _
        $region102: #{sae_forward.1} parent=73 // pred_fallthru
          _
      $region74: #{sae_forward.1} parent=5 // pred_fallthru
        _
      %p2068 = scmp.le.s32.totalorder 2, %s21
      // Predicated region
      $region103: #{sae_forward.1} parent=5 // pred_check
        %p2069 = pneg %p2068
      $region104: #{sae_forward.1} parent=5 // pred_check_branch
        %2071 = sbr.rel (%p2069) target = $region106
      $region105: #{sae_forward.1} parent=5 // pred_region
        %s2072 = ssub.s32 %s21, 2
        // Predicated region
        $region107: #{sae_forward.1} parent=105 // pred_check
          %p2073 = pneg %p187
        $region108: #{sae_forward.1} parent=105 // pred_check_branch
          %2075 = sbr.rel (%p2073) target = $region110
        $region109: #{sae_forward.1} parent=105 // pred_region
          %s2076 = sand.u32 %s172, 1
          %s2077 = scalar_lea.sflag [#allocation6], %s2076
          %s2078 = sand.u32 %s172, 1
          %s2079 = smul.addr %s2078, 256
          %s2080 = scalar_lea.vmem [#allocation5], %s2079
          %2081 = dma.done %s2077, 4096
        $region110: #{sae_forward.1} parent=105 // pred_fallthru
          _
        // Predicated region
        $region111: #{sae_forward.1} parent=105 // pred_check
          %p2082 = pneg %p215
        $region112: #{sae_forward.1} parent=105 // pred_check_branch
          %2084 = sbr.rel (%p2082) target = $region114
        $region113: #{sae_forward.1} parent=105 // pred_region
          %s2085 = sand.u32 %s200, 1
          %s2086 = scalar_lea.sflag [#allocation8], %s2085
          %s2087 = sand.u32 %s200, 1
          %s2088 = smul.addr %s2087, 256
          %s2089 = scalar_lea.vmem [#allocation7], %s2088
          %2090 = dma.done %s2086, 4096
        $region114: #{sae_forward.1} parent=105 // pred_fallthru
          _
        // Predicated region
        $region115: #{sae_forward.1} parent=105 // pred_check
          %p2091 = pneg %p241
        $region116: #{sae_forward.1} parent=105 // pred_check_branch
          %2093 = sbr.rel (%p2091) target = $region118
        $region117: #{sae_forward.1} parent=105 // pred_region
          %p2094 = scmp.lt.s32.totalorder %s32, 1
          %s2095 = scalar_select %p2094, %s32, 1
          %s2096 = scalar_lea.vmem %s7, %s2095
        $region118: #{sae_forward.1} parent=105 // pred_fallthru
          _
        // Predicated region
        $region119: #{sae_forward.1} parent=105 // pred_check
          %p2097 = pneg %p267
        $region120: #{sae_forward.1} parent=105 // pred_check_branch
          %2099 = sbr.rel (%p2097) target = $region122
        $region121: #{sae_forward.1} parent=105 // pred_region
          %p2100 = scmp.lt.s32.totalorder %s32, 1
          %s2101 = scalar_select %p2100, %s32, 1
          %s2102 = scalar_lea.vmem %s8, %s2101
        $region122: #{sae_forward.1} parent=105 // pred_fallthru
          _
      $region106: #{sae_forward.1} parent=5 // pred_fallthru
        _
    $region6: #{sae_forward.1} parent=1 // loop_footer
      %s25 = sadd.s32 1, %s21
    $region7: #{sae_forward.1} parent=1 // loop_footer_branch
      %20 = sbr.rel target = $region3
    $region8: #{sae_forward.1} parent=1 // loop_exit
      _
    %2103 = vsyncpa [#allocation6], 1
    %s2104 = scalar_lea.sflag [#allocation6], 1
    %2105 = vsyncpa %s2104, 1
    %2106 = vsyncpa [#allocation8], 1
    %s2107 = scalar_lea.sflag [#allocation8], 1
    %2108 = vsyncpa %s2107, 1

</llo_original>
